<compile_context>
chip_gen: v6e
topology: v6e:2x2x1
jax: 0.10.0
libtpu: 0.0.40
codegen_flags: <defaults>
</compile_context>

<pallas_src>
import math
import functools

import jax
import jax.numpy as jnp
from jax.experimental import pallas as pl
from jax.experimental.pallas import tpu as pltpu


# ----------------------------------------------------------------------------
# Bilinear interpolation matrix (align_corners=False), zero-padded along the
# output axis so that Rh @ x @ Rw directly yields the padded image.
# ----------------------------------------------------------------------------
def _bilinear_matrix(in_size, out_size, pad_to=None):
    scale = in_size / out_size
    dst = jnp.arange(out_size, dtype=jnp.float32)
    src = jnp.clip((dst + 0.5) * scale - 0.5, 0.0, float(in_size - 1))
    lo = jnp.floor(src).astype(jnp.int32)
    hi = jnp.minimum(lo + 1, in_size - 1)
    w_hi = src - lo.astype(jnp.float32)
    w_lo = 1.0 - w_hi
    rows = jnp.arange(out_size)
    m = jnp.zeros((out_size, in_size), jnp.float32)
    m = m.at[rows, lo].add(w_lo)
    m = m.at[rows, hi].add(w_hi)
    if pad_to is not None and pad_to > out_size:
        m = jnp.pad(m, ((0, pad_to - out_size), (0, 0)))
    return m


# ----------------------------------------------------------------------------
# VMEM budgeting / tile-size selection (v5e/v6e: 128 MiB, v7x: 64 MiB).
# ----------------------------------------------------------------------------
def _vmem_capacity_bytes():
    try:
        return int(pltpu.get_tpu_info().vmem_capacity_bytes)
    except Exception:
        return 64 * 1024 * 1024  # conservative (v7x-sized) fallback


def _step_vmem_bytes(tile_h, h_in, w_in, pad_w):
    img_blk = h_in * w_in * 2 * 2        # bf16 channel block (worst case 2 bufs)
    rh_blk = tile_h * h_in * 2 * 2       # bf16 row-interp tile, double-buffered
    rw_blk = w_in * pad_w * 2 * 2        # bf16 col-interp matrix (worst case 2 bufs)
    out_blk = tile_h * pad_w * 4 * 2     # f32 output tile, double-buffered
    cmask_blk = pad_w * 4 * 2            # f32 column mask
    # intermediates: t (f32 + bf16 copy), y (f32), epilogue temporaries + margin
    scratch = tile_h * w_in * 6 + tile_h * pad_w * 8 + (1 << 20)
    return img_blk + rh_blk + rw_blk + out_blk + cmask_blk + scratch


# MXU-friendly row-tile sizes (256 = full MXU pass on v6e/v7x, 2 passes on v5e).
_TILE_H_PREFS = (256, 128, 64, 32)


def _pick_tile_h(pad_h, h_in, w_in, pad_w, budget):
    # Single tile if the whole padded height fits comfortably in the budget.
    if pad_h <= _TILE_H_PREFS[0] and _step_vmem_bytes(pad_h, h_in, w_in, pad_w) <= budget:
        return pad_h
    for th in _TILE_H_PREFS:
        if th <= pad_h and _step_vmem_bytes(th, h_in, w_in, pad_w) <= budget:
            return th
    return 32


# ----------------------------------------------------------------------------
# Pallas kernel: one (channel, row-tile) of the normalized/resized/padded image
# per grid step, written in place into its slot of the batch buffer.
# ----------------------------------------------------------------------------
def _transform_kernel(scale_ref, bias_ref, img_ref, rh_ref, rw_ref, cmask_ref,
                      batch_hbm_ref, out_ref, *, tile_h, out_h):
    # scale_ref: (C,) SMEM  1/std
    # bias_ref:  (C,) SMEM  mean/std
    # img_ref:   (H_in, W_in)  one bf16 channel (channel dim squeezed by BlockSpec)
    # rh_ref:    (tile_h, H_in) bf16 row-interp tile (zero rows past out_h)
    # rw_ref:    (W_in, pad_w)  bf16 col-interp matrix (zero cols past out_w)
    # cmask_ref: (1, pad_w) f32 column-validity mask (precomputed host-side)
    # batch_hbm_ref: aliased (N, C, pad_h, pad_w) HBM batch buffer; never read,
    #                present only so the output can alias it in place.
    # out_ref:   (tile_h, pad_w) f32 slice of the batch buffer
    del batch_hbm_ref
    c = pl.program_id(0)
    ht = pl.program_id(1)
    row0 = ht * tile_h

    @pl.when(row0 < out_h)                     # tile intersects the resized image
    def _():
        t = jnp.dot(rh_ref[...], img_ref[...],
                    preferred_element_type=jnp.float32)            # (tile_h, W_in)
        y = jnp.dot(t.astype(jnp.bfloat16), rw_ref[...],
                    preferred_element_type=jnp.float32)            # (tile_h, pad_w)
        s = scale_ref[c]
        b = bias_ref[c]
        # Folded normalization: (x-mean)/std resampled == y/std - mean/std * R(1),
        # where R(1) == 1 inside the true resized region and 0 in the padding.

        @pl.when(row0 + tile_h <= out_h)       # fully interior: column mask only
        def _():
            out_ref[...] = s * y - b * cmask_ref[...]

        @pl.when(row0 + tile_h > out_h)        # single straddling tile: add row mask
        def _():
            rows = jax.lax.broadcasted_iota(jnp.int32, (tile_h, 1), 0) + row0
            rmask = (rows < out_h).astype(jnp.float32)
            out_ref[...] = s * y - b * (rmask * cmask_ref[...])

    @pl.when(row0 >= out_h)                    # fully in the zero padding: skip matmuls
    def _():
        out_ref[...] = jnp.zeros(out_ref.shape, out_ref.dtype)


def normalize_resize_pad_into(batched, img_idx, img, mean, std, out_hw, pad_hw,
                              tile_h=None):
    """Normalize a CHW image, bilinear-resize to out_hw, zero-pad to pad_hw and
    write the result in place into slot `img_idx` of the (N, C, pad_h, pad_w)
    batch buffer (input_output_aliases; no batch-sized re-copy)."""
    C, H_in, W_in = (int(s) for s in img.shape)
    out_h, out_w = out_hw
    pad_h, pad_w = pad_hw

    cap = _vmem_capacity_bytes()
    if tile_h is None:
        tile_h = _pick_tile_h(pad_h, H_in, W_in, pad_w, int(0.5 * cap))
    tile_h = min(int(tile_h), pad_h)
    n_tiles = -(-pad_h // tile_h)          # cdiv; edge output block is masked
    rh_rows = n_tiles * tile_h

    # bf16 interpolation matrices + bf16 image (MXU-native inputs; f32 accumulate).
    rh = _bilinear_matrix(H_in, out_h, pad_to=rh_rows).astype(jnp.bfloat16)   # (rh_rows, H_in)
    rw = _bilinear_matrix(W_in, out_w, pad_to=pad_w).T.astype(jnp.bfloat16)   # (W_in, pad_w)
    img_bf16 = img.astype(jnp.bfloat16)

    inv_std = (1.0 / std).astype(jnp.float32)      # (C,)  1/std
    bias = (mean * inv_std).astype(jnp.float32)    # (C,)  mean/std
    # Column validity (1 inside the resized width, 0 in the padding), computed
    # once host-side instead of per-tile iota/compare in the kernel epilogue.
    col_mask = (jnp.arange(pad_w, dtype=jnp.int32) < out_w).astype(jnp.float32)[None, :]

    est = _step_vmem_bytes(tile_h, H_in, W_in, pad_w)
    vmem_limit = int(max(32 << 20, min(int(0.85 * cap), 3 * est)))

    kernel = functools.partial(_transform_kernel, tile_h=tile_h, out_h=out_h)

    flops = 2 * C * rh_rows * W_in * (H_in + pad_w)
    bytes_accessed = (C * H_in * W_in * 2 + C * rh_rows * H_in * 2
                      + W_in * pad_w * 2 + C * pad_h * pad_w * 4)
    cost = pl.CostEstimate(flops=flops, transcendentals=0,
                           bytes_accessed=bytes_accessed)

    def attempt(single_buffer):
        if single_buffer:
            # Rw never changes block index -> a second pipeline buffer is wasted VMEM.
            rw_spec = pl.BlockSpec((W_in, pad_w), lambda c, h: (0, 0),
                                   pipeline_mode=pl.Buffered(1))
        else:
            rw_spec = pl.BlockSpec((W_in, pad_w), lambda c, h: (0, 0))

        in_specs = [
            pl.BlockSpec(memory_space=pltpu.MemorySpace.SMEM),   # 1/std     (C,)
            pl.BlockSpec(memory_space=pltpu.MemorySpace.SMEM),   # mean/std  (C,)
            # Channel block changes only with c (outer axis); h is inner, so the
            # bf16 channel stays resident in VMEM across all row tiles.
            pl.BlockSpec((pl.Squeezed(), H_in, W_in), lambda c, h: (c, 0, 0)),
            pl.BlockSpec((tile_h, H_in), lambda c, h: (h, 0)),   # row-interp tile
            rw_spec,                                             # col-interp (grid-constant)
            pl.BlockSpec((1, pad_w), lambda c, h: (0, 0)),       # column mask
            pl.BlockSpec(memory_space=pl.ANY),                   # aliased batch buffer (HBM)
        ]
        out_specs = pl.BlockSpec((pl.Squeezed(), pl.Squeezed(), tile_h, pad_w),
                                 lambda c, h: (img_idx, c, h, 0))
        return pl.pallas_call(
            kernel,
            out_shape=jax.ShapeDtypeStruct(batched.shape, batched.dtype),
            grid=(C, n_tiles),
            in_specs=in_specs,
            out_specs=out_specs,
            input_output_aliases={6: 0},     # batch buffer written in place
            compiler_params=pltpu.CompilerParams(
                # C=3 outer axis "arbitrary": v7x megacore shards the balanced
                # row-tile axis instead of the 3-channel axis.
                dimension_semantics=("arbitrary", "parallel"),
                vmem_limit_bytes=vmem_limit),
            cost_estimate=cost,
        )(inv_std, bias, img_bf16, rh, rw, col_mask, batched)

    try:
        return attempt(single_buffer=True)
    except Exception:
        # Fallback for Pallas builds that reject single-buffered pipeline_mode.
        return attempt(single_buffer=False)


def resize_boxes(boxes, original_size, new_size):
    """boxes: (N, 4) [xmin, ymin, xmax, ymax]; sizes are (h, w).

    Plain JAX: an (N, 4) elementwise multiply is far too small for a Pallas
    kernel (masked 4-lane stores + launch overhead dwarf the work).
    """
    rh = float(new_size[0]) / float(original_size[0])
    rw = float(new_size[1]) / float(original_size[1])
    ratios = jnp.array([rw, rh, rw, rh], dtype=jnp.float32)
    return boxes.astype(jnp.float32) * ratios[None, :]


# ----------------------------------------------------------------------------
# Module wrapper (glue in plain Python/JAX)
# ----------------------------------------------------------------------------
class GeneralizedRCNNTransform:
    def __init__(self, min_size, max_size, image_mean, image_std):
        if not isinstance(min_size, (list, tuple)):
            min_size = (min_size,)
        self.min_size = min_size
        self.max_size = max_size
        self.image_mean = jnp.asarray(image_mean, jnp.float32)
        self.image_std = jnp.asarray(image_std, jnp.float32)
        self.training = False  # eval mode: size = min_size[-1]
        self._tile_h_override = None
        # TODO(synk): training-mode random size choice (torch_choice) is host-side
        # randomness with no Pallas equivalent; eval-mode semantics implemented.

    def _output_size(self, h, w):
        size = float(self.min_size[-1])
        min_s, max_s = float(min(h, w)), float(max(h, w))
        scale = size / min_s
        if max_s * scale > self.max_size:
            scale = self.max_size / max_s
        # F.interpolate with scale_factor: out = floor(in * scale)
        return int(math.floor(h * scale)), int(math.floor(w * scale))

    def __call__(self, images, targets=None):
        out_sizes = [self._output_size(int(img.shape[1]), int(img.shape[2]))
                     for img in images]
        size_div = 32
        max_h = max(s[0] for s in out_sizes)
        max_w = max(s[1] for s in out_sizes)
        pad_h = int(math.ceil(max_h / size_div) * size_div)
        pad_w = int(math.ceil(max_w / size_div) * size_div)

        N = len(images)
        C = int(images[0].shape[0])
        # Preallocated batch buffer; each per-image pallas_call writes its slot
        # in place via input_output_aliases (no jnp.stack batch re-copy).
        batched = jnp.zeros((N, C, pad_h, pad_w), jnp.float32)

        new_targets = [] if targets is not None else None
        for i, img in enumerate(images):
            batched = normalize_resize_pad_into(
                batched, i, img, self.image_mean, self.image_std,
                out_sizes[i], (pad_h, pad_w), tile_h=self._tile_h_override)
            if targets is not None:
                h, w = int(img.shape[1]), int(img.shape[2])
                t = dict(targets[i])
                t["boxes"] = resize_boxes(t["boxes"], (h, w), out_sizes[i])
                new_targets.append(t)

        image_list = (batched, out_sizes)   # mimic ImageList(tensors, image_sizes)
        return image_list, (new_targets if targets is not None else targets)


# ----------------------------------------------------------------------------
# Pure-JAX (f32) reference for correctness checking
# ----------------------------------------------------------------------------
def _reference(img, mean, std, out_hw, pad_hw):
    x = (img - mean[:, None, None]) / std[:, None, None]
    rh = _bilinear_matrix(img.shape[1], out_hw[0], pad_to=pad_hw[0])
    rw = _bilinear_matrix(img.shape[2], out_hw[1], pad_to=pad_hw[1])
    return jnp.einsum("oi,cij,pj->cop", rh, x, rw)


if __name__ == "__main__":
    key = jax.random.PRNGKey(0)
    k1, k2 = jax.random.split(key, 2)

    # Small shapes consistent with [C, H, W] image lists of varying sizes.
    img1 = jax.random.uniform(k1, (3, 20, 24), dtype=jnp.float32)
    img2 = jax.random.uniform(k2, (3, 24, 18), dtype=jnp.float32)
    images = [img1, img2]

    boxes1 = jnp.array([[1.0, 2.0, 10.0, 12.0],
                        [3.0, 4.0, 20.0, 18.0],
                        [0.0, 0.0, 24.0, 20.0]], dtype=jnp.float32)
    boxes2 = jnp.array([[2.0, 1.0, 15.0, 20.0],
                        [5.0, 6.0, 17.0, 22.0]], dtype=jnp.float32)
    targets = [{"boxes": boxes1}, {"boxes": boxes2}]

    transform = GeneralizedRCNNTransform(
        min_size=32, max_size=64,
        image_mean=[0.485, 0.456, 0.406],
        image_std=[0.229, 0.224, 0.225])

    def check(batched, image_sizes, new_targets):
        # bf16 matmul inputs with f32 accumulation -> bf16-level tolerances
        # (documented: ~1/std amplification of bf16 rounding, <= ~5e-2 abs).
        pad_hw = (batched.shape[2], batched.shape[3])
        for i, img in enumerate(images):
            ref = _reference(img, transform.image_mean, transform.image_std,
                             image_sizes[i], pad_hw)
            assert jnp.allclose(batched[i], ref, atol=5e-2, rtol=2e-2), \
                f"image {i} mismatch"
            h, w = int(img.shape[1]), int(img.shape[2])
            nh, nw = image_sizes[i]
            ratios = jnp.array([nw / w, nh / h, nw / w, nh / h], jnp.float32)
            ref_boxes = targets[i]["boxes"] * ratios[None, :]
            assert jnp.allclose(new_targets[i]["boxes"], ref_boxes,
                                atol=1e-5, rtol=1e-5), f"boxes {i} mismatch"

    # Default tiling (single row tile per image at these small sizes).
    (batched, image_sizes), new_targets = transform(images, targets)
    batched = jax.block_until_ready(batched)
    for t in new_targets:
        jax.block_until_ready(t["boxes"])
    check(batched, image_sizes, new_targets)

    # Force a small row tile to exercise the multi-tile path and all three
    # epilogue branches (interior / straddling / all-padding) at small shapes.
    transform._tile_h_override = 32
    (batched2, image_sizes2), new_targets2 = transform(images, targets)
    batched2 = jax.block_until_ready(batched2)
    check(batched2, image_sizes2, new_targets2)

    print("KERNEL_OK")
</pallas_src>

<mosaic_0001>
module attributes {stable_mosaic.version = 11 : i64} {
  func.func @_transform_kernel(%arg0: i32, %arg1: i32, %arg2: memref<3xf32, #tpu.memory_space<smem>>, %arg3: memref<3xf32, #tpu.memory_space<smem>>, %arg4: memref<1x20x24xbf16, #tpu.memory_space<vmem>>, %arg5: memref<64x20xbf16, #tpu.memory_space<vmem>>, %arg6: memref<24x64xbf16, #tpu.memory_space<vmem>>, %arg7: memref<1x64xf32, #tpu.memory_space<vmem>>, %arg8: memref<2x3x64x64xf32, #tpu.memory_space<any>>, %arg9: memref<1x1x64x64xf32, #tpu.memory_space<vmem>>) attributes {dimension_semantics = [#tpu.dimension_semantics<arbitrary>, #tpu.dimension_semantics<parallel>], iteration_bounds = array<i64: 3, 1>, scalar_prefetch = 0 : i64, scratch_operands = 0 : i64, tpu.core_type = #tpu.core_type<tc>, window_params = [{transform_indices = @transform_0, window_bounds = array<i64: 3>}, {transform_indices = @transform_1, window_bounds = array<i64: 3>}, {transform_indices = @transform_2, window_bounds = array<i64: 1, 20, 24>}, {transform_indices = @transform_3, window_bounds = array<i64: 64, 20>}, {pipeline_mode = #tpu.pipeline_mode<synchronous>, transform_indices = @transform_4, window_bounds = array<i64: 24, 64>}, {pipeline_mode = #tpu.pipeline_mode<synchronous>, transform_indices = @transform_5, window_bounds = array<i64: 1, 64>}, {}, {transform_indices = @transform_7, window_bounds = array<i64: 1, 1, 64, 64>}]} {
    %c64_i32 = arith.constant 64 : i32
    %0 = arith.muli %arg1, %c64_i32 : i32
    %c32_i32 = arith.constant 32 : i32
    %1 = arith.cmpi slt, %0, %c32_i32 : i32
    %2 = arith.extui %1 : i1 to i32
    %c0_i32 = arith.constant 0 : i32
    %3 = arith.cmpi ne, %2, %c0_i32 : i32
    scf.if %3 {
      %c0 = arith.constant 0 : index
      %c0_2 = arith.constant 0 : index
      %7 = vector.load %arg5[%c0, %c0_2] : memref<64x20xbf16, #tpu.memory_space<vmem>>, vector<64x20xbf16>
      %c0_3 = arith.constant 0 : index
      %c0_4 = arith.constant 0 : index
      %c0_5 = arith.constant 0 : index
      %8 = vector.load %arg4[%c0_3, %c0_4, %c0_5] : memref<1x20x24xbf16, #tpu.memory_space<vmem>>, vector<1x20x24xbf16>
      %9 = vector.shape_cast %8 : vector<1x20x24xbf16> to vector<20x24xbf16>
      %cst = arith.constant dense<0.000000e+00> : vector<64x24xf32>
      %10 = tpu.matmul %7, %9, %cst {dimension_numbers = #tpu.dot_dimension_numbers<[1], [0], [0], [1], [0, 0, 1, 1], [], []>} : vector<64x20xbf16>, vector<20x24xbf16>, vector<64x24xf32> -> vector<64x24xf32>
      %11 = arith.truncf %10 : vector<64x24xf32> to vector<64x24xbf16>
      %c0_6 = arith.constant 0 : index
      %c0_7 = arith.constant 0 : index
      %12 = vector.load %arg6[%c0_6, %c0_7] : memref<24x64xbf16, #tpu.memory_space<vmem>>, vector<24x64xbf16>
      %cst_8 = arith.constant dense<0.000000e+00> : vector<64x64xf32>
      %13 = tpu.matmul %11, %12, %cst_8 {dimension_numbers = #tpu.dot_dimension_numbers<[1], [0], [0], [1], [0, 0, 1, 1], [], []>} : vector<64x24xbf16>, vector<24x64xbf16>, vector<64x64xf32> -> vector<64x64xf32>
      %14 = arith.index_cast %arg0 : i32 to index
      %15 = memref.load %arg2[%14] : memref<3xf32, #tpu.memory_space<smem>>
      %16 = arith.index_cast %arg0 : i32 to index
      %17 = memref.load %arg3[%16] : memref<3xf32, #tpu.memory_space<smem>>
      %c64_i32_9 = arith.constant 64 : i32
      %18 = arith.addi %0, %c64_i32_9 : i32
      %c32_i32_10 = arith.constant 32 : i32
      %19 = arith.cmpi sle, %18, %c32_i32_10 : i32
      %20 = arith.extui %19 : i1 to i32
      %c0_i32_11 = arith.constant 0 : i32
      %21 = arith.cmpi ne, %20, %c0_i32_11 : i32
      scf.if %21 {
        %26 = vector.broadcast %15 : f32 to vector<64x64xf32>
        %27 = arith.mulf %26, %13 : vector<64x64xf32>
        %c0_15 = arith.constant 0 : index
        %c0_16 = arith.constant 0 : index
        %28 = vector.load %arg7[%c0_15, %c0_16] : memref<1x64xf32, #tpu.memory_space<vmem>>, vector<1x64xf32>
        %29 = vector.broadcast %17 : f32 to vector<1x64xf32>
        %30 = arith.mulf %29, %28 : vector<1x64xf32>
        %31 = vector.broadcast %30 : vector<1x64xf32> to vector<64x64xf32>
        %32 = arith.subf %27, %31 : vector<64x64xf32>
        %c0_17 = arith.constant 0 : index
        %c0_18 = arith.constant 0 : index
        %c0_19 = arith.constant 0 : index
        %c0_20 = arith.constant 0 : index
        %33 = vector.load %arg9[%c0_17, %c0_18, %c0_19, %c0_20] : memref<1x1x64x64xf32, #tpu.memory_space<vmem>>, vector<1x1x64x64xf32>
        %34 = vector.shape_cast %33 : vector<1x1x64x64xf32> to vector<64x64xf32>
        %35 = vector.shape_cast %32 : vector<64x64xf32> to vector<1x1x64x64xf32>
        tpu.vector_store %arg9[%c0_17, %c0_18, %c0_19, %c0_20], %35 {strides = array<i32>} : memref<1x1x64x64xf32, #tpu.memory_space<vmem>>, vector<1x1x64x64xf32>,
      } else {
      }
      %c64_i32_12 = arith.constant 64 : i32
      %22 = arith.addi %0, %c64_i32_12 : i32
      %c32_i32_13 = arith.constant 32 : i32
      %23 = arith.cmpi sgt, %22, %c32_i32_13 : i32
      %24 = arith.extui %23 : i1 to i32
      %c0_i32_14 = arith.constant 0 : i32
      %25 = arith.cmpi ne, %24, %c0_i32_14 : i32
      scf.if %25 {
        %26 = tpu.iota {dimensions = array<i32: 0>} : vector<64x1xi32>
        %27 = vector.broadcast %0 : i32 to vector<64x1xi32>
        %28 = arith.addi %26, %27 : vector<64x1xi32>
        %c32_i32_15 = arith.constant 32 : i32
        %29 = vector.broadcast %c32_i32_15 : i32 to vector<64x1xi32>
        %30 = arith.cmpi slt, %28, %29 : vector<64x1xi32>
        %31 = arith.extui %30 : vector<64x1xi1> to vector<64x1xi32>
        %32 = arith.sitofp %31 : vector<64x1xi32> to vector<64x1xf32>
        %33 = vector.broadcast %15 : f32 to vector<64x64xf32>
        %34 = arith.mulf %33, %13 : vector<64x64xf32>
        %c0_16 = arith.constant 0 : index
        %c0_17 = arith.constant 0 : index
        %35 = vector.load %arg7[%c0_16, %c0_17] : memref<1x64xf32, #tpu.memory_space<vmem>>, vector<1x64xf32>
        %36 = vector.broadcast %32 : vector<64x1xf32> to vector<64x64xf32>
        %37 = vector.broadcast %35 : vector<1x64xf32> to vector<64x64xf32>
        %38 = arith.mulf %36, %37 : vector<64x64xf32>
        %39 = vector.broadcast %17 : f32 to vector<64x64xf32>
        %40 = arith.mulf %39, %38 : vector<64x64xf32>
        %41 = arith.subf %34, %40 : vector<64x64xf32>
        %c0_18 = arith.constant 0 : index
        %c0_19 = arith.constant 0 : index
        %c0_20 = arith.constant 0 : index
        %c0_21 = arith.constant 0 : index
        %42 = vector.load %arg9[%c0_18, %c0_19, %c0_20, %c0_21] : memref<1x1x64x64xf32, #tpu.memory_space<vmem>>, vector<1x1x64x64xf32>
        %43 = vector.shape_cast %42 : vector<1x1x64x64xf32> to vector<64x64xf32>
        %44 = vector.shape_cast %41 : vector<64x64xf32> to vector<1x1x64x64xf32>
        tpu.vector_store %arg9[%c0_18, %c0_19, %c0_20, %c0_21], %44 {strides = array<i32>} : memref<1x1x64x64xf32, #tpu.memory_space<vmem>>, vector<1x1x64x64xf32>,
      } else {
      }
    } else {
    }
    %c32_i32_0 = arith.constant 32 : i32
    %4 = arith.cmpi sge, %0, %c32_i32_0 : i32
    %5 = arith.extui %4 : i1 to i32
    %c0_i32_1 = arith.constant 0 : i32
    %6 = arith.cmpi ne, %5, %c0_i32_1 : i32
    scf.if %6 {
      %cst = arith.constant 0.000000e+00 : f32
      %7 = vector.broadcast %cst : f32 to vector<64x64xf32>
      %c0 = arith.constant 0 : index
      %c0_2 = arith.constant 0 : index
      %c0_3 = arith.constant 0 : index
      %c0_4 = arith.constant 0 : index
      %8 = vector.load %arg9[%c0, %c0_2, %c0_3, %c0_4] : memref<1x1x64x64xf32, #tpu.memory_space<vmem>>, vector<1x1x64x64xf32>
      %9 = vector.shape_cast %8 : vector<1x1x64x64xf32> to vector<64x64xf32>
      %10 = vector.shape_cast %7 : vector<64x64xf32> to vector<1x1x64x64xf32>
      tpu.vector_store %arg9[%c0, %c0_2, %c0_3, %c0_4], %10 {strides = array<i32>} : memref<1x1x64x64xf32, #tpu.memory_space<vmem>>, vector<1x1x64x64xf32>,
    } else {
    }
    return
  }
  func.func @transform_0(%arg0: i32, %arg1: i32) -> i32 {
    %c0_i32 = arith.constant 0 : i32
    %c0_i32_0 = arith.constant 0 : i32
    return %c0_i32 : i32
  }
  func.func @transform_1(%arg0: i32, %arg1: i32) -> i32 {
    %c0_i32 = arith.constant 0 : i32
    %c0_i32_0 = arith.constant 0 : i32
    return %c0_i32 : i32
  }
  func.func @transform_2(%arg0: i32, %arg1: i32) -> (i32, i32, i32) {
    %c0_i32 = arith.constant 0 : i32
    %c0_i32_0 = arith.constant 0 : i32
    %c0_i32_1 = arith.constant 0 : i32
    return %arg0, %c0_i32, %c0_i32_0 : i32, i32, i32
  }
  func.func @transform_3(%arg0: i32, %arg1: i32) -> (i32, i32) {
    %c0_i32 = arith.constant 0 : i32
    %c0_i32_0 = arith.constant 0 : i32
    return %arg1, %c0_i32 : i32, i32
  }
  func.func @transform_4(%arg0: i32, %arg1: i32) -> (i32, i32) {
    %c0_i32 = arith.constant 0 : i32
    %c0_i32_0 = arith.constant 0 : i32
    %c0_i32_1 = arith.constant 0 : i32
    return %c0_i32, %c0_i32_0 : i32, i32
  }
  func.func @transform_5(%arg0: i32, %arg1: i32) -> (i32, i32) {
    %c0_i32 = arith.constant 0 : i32
    %c0_i32_0 = arith.constant 0 : i32
    %c0_i32_1 = arith.constant 0 : i32
    return %c0_i32, %c0_i32_0 : i32, i32
  }
  func.func @transform_7(%arg0: i32, %arg1: i32) -> (i32, i32, i32, i32) {
    %c0_i32 = arith.constant 0 : i32
    %c0_i32_0 = arith.constant 0 : i32
    %c0_i32_1 = arith.constant 0 : i32
    return %c0_i32, %arg0, %arg1, %c0_i32_0 : i32, i32, i32, i32
  }
}

module attributes {stable_mosaic.version = 11 : i64} {
  func.func @_transform_kernel(%arg0: i32, %arg1: i32, %arg2: memref<3xf32, #tpu.memory_space<smem>>, %arg3: memref<3xf32, #tpu.memory_space<smem>>, %arg4: memref<1x20x24xbf16, #tpu.memory_space<vmem>>, %arg5: memref<64x20xbf16, #tpu.memory_space<vmem>>, %arg6: memref<24x64xbf16, #tpu.memory_space<vmem>>, %arg7: memref<1x64xf32, #tpu.memory_space<vmem>>, %arg8: memref<2x3x64x64xf32, #tpu.memory_space<any>>, %arg9: memref<1x1x64x64xf32, #tpu.memory_space<vmem>>) attributes {dimension_semantics = [#tpu.dimension_semantics<arbitrary>, #tpu.dimension_semantics<parallel>], iteration_bounds = array<i64: 3, 1>, scalar_prefetch = 0 : i64, scratch_operands = 0 : i64, tpu.core_type = #tpu.core_type<tc>, window_params = [{transform_indices = @transform_0, window_bounds = array<i64: 3>}, {transform_indices = @transform_1, window_bounds = array<i64: 3>}, {transform_indices = @transform_2, window_bounds = array<i64: 1, 20, 24>}, {transform_indices = @transform_3, window_bounds = array<i64: 64, 20>}, {pipeline_mode = #tpu.pipeline_mode<synchronous>, transform_indices = @transform_4, window_bounds = array<i64: 24, 64>}, {pipeline_mode = #tpu.pipeline_mode<synchronous>, transform_indices = @transform_5, window_bounds = array<i64: 1, 64>}, {}, {transform_indices = @transform_7, window_bounds = array<i64: 1, 1, 64, 64>}]} {
    %c64_i32 = arith.constant 64 : i32
    %0 = arith.muli %arg1, %c64_i32 : i32
    %c32_i32 = arith.constant 32 : i32
    %1 = arith.cmpi slt, %0, %c32_i32 : i32
    %2 = arith.extui %1 : i1 to i32
    %c0_i32 = arith.constant 0 : i32
    %3 = arith.cmpi ne, %2, %c0_i32 : i32
    scf.if %3 {
      %c0 = arith.constant 0 : index
      %c0_2 = arith.constant 0 : index
      %7 = vector.load %arg5[%c0, %c0_2] : memref<64x20xbf16, #tpu.memory_space<vmem>>, vector<64x20xbf16>
      %c0_3 = arith.constant 0 : index
      %c0_4 = arith.constant 0 : index
      %c0_5 = arith.constant 0 : index
      %8 = vector.load %arg4[%c0_3, %c0_4, %c0_5] : memref<1x20x24xbf16, #tpu.memory_space<vmem>>, vector<1x20x24xbf16>
      %9 = vector.shape_cast %8 : vector<1x20x24xbf16> to vector<20x24xbf16>
      %cst = arith.constant dense<0.000000e+00> : vector<64x24xf32>
      %10 = tpu.matmul %7, %9, %cst {dimension_numbers = #tpu.dot_dimension_numbers<[1], [0], [0], [1], [0, 0, 1, 1], [], []>} : vector<64x20xbf16>, vector<20x24xbf16>, vector<64x24xf32> -> vector<64x24xf32>
      %11 = arith.truncf %10 : vector<64x24xf32> to vector<64x24xbf16>
      %c0_6 = arith.constant 0 : index
      %c0_7 = arith.constant 0 : index
      %12 = vector.load %arg6[%c0_6, %c0_7] : memref<24x64xbf16, #tpu.memory_space<vmem>>, vector<24x64xbf16>
      %cst_8 = arith.constant dense<0.000000e+00> : vector<64x64xf32>
      %13 = tpu.matmul %11, %12, %cst_8 {dimension_numbers = #tpu.dot_dimension_numbers<[1], [0], [0], [1], [0, 0, 1, 1], [], []>} : vector<64x24xbf16>, vector<24x64xbf16>, vector<64x64xf32> -> vector<64x64xf32>
      %14 = arith.index_cast %arg0 : i32 to index
      %15 = memref.load %arg2[%14] : memref<3xf32, #tpu.memory_space<smem>>
      %16 = arith.index_cast %arg0 : i32 to index
      %17 = memref.load %arg3[%16] : memref<3xf32, #tpu.memory_space<smem>>
      %c64_i32_9 = arith.constant 64 : i32
      %18 = arith.addi %0, %c64_i32_9 : i32
      %c32_i32_10 = arith.constant 32 : i32
      %19 = arith.cmpi sle, %18, %c32_i32_10 : i32
      %20 = arith.extui %19 : i1 to i32
      %c0_i32_11 = arith.constant 0 : i32
      %21 = arith.cmpi ne, %20, %c0_i32_11 : i32
      scf.if %21 {
        %26 = vector.broadcast %15 : f32 to vector<64x64xf32>
        %27 = arith.mulf %26, %13 : vector<64x64xf32>
        %c0_15 = arith.constant 0 : index
        %c0_16 = arith.constant 0 : index
        %28 = vector.load %arg7[%c0_15, %c0_16] : memref<1x64xf32, #tpu.memory_space<vmem>>, vector<1x64xf32>
        %29 = vector.broadcast %17 : f32 to vector<1x64xf32>
        %30 = arith.mulf %29, %28 : vector<1x64xf32>
        %31 = vector.broadcast %30 : vector<1x64xf32> to vector<64x64xf32>
        %32 = arith.subf %27, %31 : vector<64x64xf32>
        %c0_17 = arith.constant 0 : index
        %c0_18 = arith.constant 0 : index
        %c0_19 = arith.constant 0 : index
        %c0_20 = arith.constant 0 : index
        %33 = vector.load %arg9[%c0_17, %c0_18, %c0_19, %c0_20] : memref<1x1x64x64xf32, #tpu.memory_space<vmem>>, vector<1x1x64x64xf32>
        %34 = vector.shape_cast %33 : vector<1x1x64x64xf32> to vector<64x64xf32>
        %35 = vector.shape_cast %32 : vector<64x64xf32> to vector<1x1x64x64xf32>
        tpu.vector_store %arg9[%c0_17, %c0_18, %c0_19, %c0_20], %35 {strides = array<i32>} : memref<1x1x64x64xf32, #tpu.memory_space<vmem>>, vector<1x1x64x64xf32>,
      } else {
      }
      %c64_i32_12 = arith.constant 64 : i32
      %22 = arith.addi %0, %c64_i32_12 : i32
      %c32_i32_13 = arith.constant 32 : i32
      %23 = arith.cmpi sgt, %22, %c32_i32_13 : i32
      %24 = arith.extui %23 : i1 to i32
      %c0_i32_14 = arith.constant 0 : i32
      %25 = arith.cmpi ne, %24, %c0_i32_14 : i32
      scf.if %25 {
        %26 = tpu.iota {dimensions = array<i32: 0>} : vector<64x1xi32>
        %27 = vector.broadcast %0 : i32 to vector<64x1xi32>
        %28 = arith.addi %26, %27 : vector<64x1xi32>
        %c32_i32_15 = arith.constant 32 : i32
        %29 = vector.broadcast %c32_i32_15 : i32 to vector<64x1xi32>
        %30 = arith.cmpi slt, %28, %29 : vector<64x1xi32>
        %31 = arith.extui %30 : vector<64x1xi1> to vector<64x1xi32>
        %32 = arith.sitofp %31 : vector<64x1xi32> to vector<64x1xf32>
        %33 = vector.broadcast %15 : f32 to vector<64x64xf32>
        %34 = arith.mulf %33, %13 : vector<64x64xf32>
        %c0_16 = arith.constant 0 : index
        %c0_17 = arith.constant 0 : index
        %35 = vector.load %arg7[%c0_16, %c0_17] : memref<1x64xf32, #tpu.memory_space<vmem>>, vector<1x64xf32>
        %36 = vector.broadcast %32 : vector<64x1xf32> to vector<64x64xf32>
        %37 = vector.broadcast %35 : vector<1x64xf32> to vector<64x64xf32>
        %38 = arith.mulf %36, %37 : vector<64x64xf32>
        %39 = vector.broadcast %17 : f32 to vector<64x64xf32>
        %40 = arith.mulf %39, %38 : vector<64x64xf32>
        %41 = arith.subf %34, %40 : vector<64x64xf32>
        %c0_18 = arith.constant 0 : index
        %c0_19 = arith.constant 0 : index
        %c0_20 = arith.constant 0 : index
        %c0_21 = arith.constant 0 : index
        %42 = vector.load %arg9[%c0_18, %c0_19, %c0_20, %c0_21] : memref<1x1x64x64xf32, #tpu.memory_space<vmem>>, vector<1x1x64x64xf32>
        %43 = vector.shape_cast %42 : vector<1x1x64x64xf32> to vector<64x64xf32>
        %44 = vector.shape_cast %41 : vector<64x64xf32> to vector<1x1x64x64xf32>
        tpu.vector_store %arg9[%c0_18, %c0_19, %c0_20, %c0_21], %44 {strides = array<i32>} : memref<1x1x64x64xf32, #tpu.memory_space<vmem>>, vector<1x1x64x64xf32>,
      } else {
      }
    } else {
    }
    %c32_i32_0 = arith.constant 32 : i32
    %4 = arith.cmpi sge, %0, %c32_i32_0 : i32
    %5 = arith.extui %4 : i1 to i32
    %c0_i32_1 = arith.constant 0 : i32
    %6 = arith.cmpi ne, %5, %c0_i32_1 : i32
    scf.if %6 {
      %cst = arith.constant 0.000000e+00 : f32
      %7 = vector.broadcast %cst : f32 to vector<64x64xf32>
      %c0 = arith.constant 0 : index
      %c0_2 = arith.constant 0 : index
      %c0_3 = arith.constant 0 : index
      %c0_4 = arith.constant 0 : index
      %8 = vector.load %arg9[%c0, %c0_2, %c0_3, %c0_4] : memref<1x1x64x64xf32, #tpu.memory_space<vmem>>, vector<1x1x64x64xf32>
      %9 = vector.shape_cast %8 : vector<1x1x64x64xf32> to vector<64x64xf32>
      %10 = vector.shape_cast %7 : vector<64x64xf32> to vector<1x1x64x64xf32>
      tpu.vector_store %arg9[%c0, %c0_2, %c0_3, %c0_4], %10 {strides = array<i32>} : memref<1x1x64x64xf32, #tpu.memory_space<vmem>>, vector<1x1x64x64xf32>,
    } else {
    }
    return
  }
  func.func @transform_0(%arg0: i32, %arg1: i32) -> i32 {
    %c0_i32 = arith.constant 0 : i32
    %c0_i32_0 = arith.constant 0 : i32
    return %c0_i32 : i32
  }
  func.func @transform_1(%arg0: i32, %arg1: i32) -> i32 {
    %c0_i32 = arith.constant 0 : i32
    %c0_i32_0 = arith.constant 0 : i32
    return %c0_i32 : i32
  }
  func.func @transform_2(%arg0: i32, %arg1: i32) -> (i32, i32, i32) {
    %c0_i32 = arith.constant 0 : i32
    %c0_i32_0 = arith.constant 0 : i32
    %c0_i32_1 = arith.constant 0 : i32
    return %arg0, %c0_i32, %c0_i32_0 : i32, i32, i32
  }
  func.func @transform_3(%arg0: i32, %arg1: i32) -> (i32, i32) {
    %c0_i32 = arith.constant 0 : i32
    %c0_i32_0 = arith.constant 0 : i32
    return %arg1, %c0_i32 : i32, i32
  }
  func.func @transform_4(%arg0: i32, %arg1: i32) -> (i32, i32) {
    %c0_i32 = arith.constant 0 : i32
    %c0_i32_0 = arith.constant 0 : i32
    %c0_i32_1 = arith.constant 0 : i32
    return %c0_i32, %c0_i32_0 : i32, i32
  }
  func.func @transform_5(%arg0: i32, %arg1: i32) -> (i32, i32) {
    %c0_i32 = arith.constant 0 : i32
    %c0_i32_0 = arith.constant 0 : i32
    %c0_i32_1 = arith.constant 0 : i32
    return %c0_i32, %c0_i32_0 : i32, i32
  }
  func.func @transform_7(%arg0: i32, %arg1: i32) -> (i32, i32, i32, i32) {
    %c0_i32 = arith.constant 0 : i32
    %c0_i32_0 = arith.constant 0 : i32
    %c0_i32_1 = arith.constant 0 : i32
    return %c0_i32, %arg0, %arg1, %c0_i32_0 : i32, i32, i32, i32
  }
}

</mosaic_0001>

<llo_original>
// kernel: tpu_custom_call.1
$region0: #{tpu_custom_call.1}
  #allocation0 [shape = 'u32[]', space=smem, size = 0x4, offset = 0x4, fixed_abs, tag = 'smem constant byte address 0x4 - core index']
  #allocation1 [shape = 'u32[144,128]{1,0:T(1,128)}', space=vmem, size = 0x12000, scoped, tag = 'internal scratch']
  %s0 = inlined_call_operand.vmem [shape: f32[3], index: 0, kind: input, shape index: {}]
  %s1 = inlined_call_operand.vmem [shape: f32[3], index: 1, kind: input, shape index: {}]
  %s2 = inlined_call_operand.vmem [shape: bf16[3,20,24], index: 2, kind: input, shape index: {}]
  %s3 = inlined_call_operand.vmem [shape: bf16[64,20], index: 3, kind: input, shape index: {}]
  %s4 = inlined_call_operand.vmem [shape: bf16[24,64], index: 4, kind: input, shape index: {}]
  %s5 = inlined_call_operand.vmem [shape: f32[1,64], index: 5, kind: input, shape index: {}]
  %s6 = inlined_call_operand.hbm [shape: f32[2,3,64,64], index: 6, kind: input, shape index: {}, may-alias: {6,7}]
  %s7 = inlined_call_operand.hbm [shape: f32[2,3,64,64], index: 7, kind: output, shape index: {}, may-alias: {6,7}]
  %s8 = sld [smem:[#allocation0]]
  $region81: #{tpu_custom_call.1} parent=0
    _
  %s10 = ssub.s32 1, %s8
  %s11 = scalar_select 0, %s10, %s8
  $region1: #{tpu_custom_call.1} parent=0
    #allocation2 [shape = 'u8[512]{0}', space=smem, size = 0x200, scoped, tag = 'input window, operand 0, single buffered']
    #allocation3 [shape = 's32[2]{0}', space=sflag, size = 0x8, scoped, tag = 'scoped memory for tpu_custom_call.1']
    #allocation4 [shape = 's32[2]{0}', space=sflag, size = 0x8, scoped, tag = 'scoped memory for tpu_custom_call.1']
    #allocation5 [shape = 'u8[512]{0}', space=smem, size = 0x200, scoped, tag = 'input window, operand 1, single buffered']
    #allocation6 [shape = 's32[1]{0}', space=sflag, size = 0x4, scoped, tag = 'scoped memory for tpu_custom_call.1']
    #allocation7 [shape = 'u8[65536]{0}', space=vmem, size = 0x10000, scoped, tag = 'output window, operand 0']
    %12 = vsyncpa [#allocation4], 0
    %13 = vsyncpa [#allocation6], 0
    %14 = vsyncpa [#allocation3], 0
    %s15 = scalar_lea.sflag [#allocation3], 1
    %16 = vsyncpa %s15, 0
    loop: start=0, step=1, limit=5
    $region2: #{tpu_custom_call.1} parent=1 // loop_pre_header
      _
    $region3: #{tpu_custom_call.1} parent=1 // loop_header
      %s18 = sphi 0, %s22
      %p19 = scmp.ge.s32.totalorder %s18, 5
      %s25 = sphi 0, %s37
      %s26 = sphi 0, %s33
      %s27 = sphi 0, %s25
      %s28 = sphi 0, %s26
      %s29 = sphi 0, %s27
      %s30 = sphi 0, %s28
      %s38 = sphi 0, %s38
      %s40 = sphi 0, %s38
      %s41 = sphi 0, %s40
      %s55 = sphi 0, %s41
      %s59 = sphi 0, %s59
      %s61 = sphi 0, %s59
      %s62 = sphi 0, %s61
      %s76 = sphi 0, %s62
      %s82 = sphi 0, %s84
      %s85 = sphi 0, %s82
      %s86 = sphi 0, %s85
      %s102 = sphi 0, %s86
      %s108 = sphi 0, %s110
      %s111 = sphi 0, %s108
      %s112 = sphi 0, %s111
      %s128 = sphi 0, %s112
      %s132 = sphi 0, %s132
      %s134 = sphi 0, %s132
      %s135 = sphi 0, %s134
      %s149 = sphi 0, %s135
      %s153 = sphi 0, %s153
      %s155 = sphi 0, %s153
      %s156 = sphi 0, %s155
      %s170 = sphi 0, %s156
      %s178 = sphi 0, %s180
      %s181 = sphi 0, %s178
      %s182 = sphi 0, %s181
      %s198 = sphi 0, %s182
    $region4: #{tpu_custom_call.1} parent=1 // loop_header_branch
      %21 = sbr.rel (%p19) target = $region8
    $region5: #{tpu_custom_call.1} parent=1 // loop_body
      %s23 = ssub.s32 %s18, 1
      %s24 = ssub.s32 %s18, 2
      %s31 = sadd.s32 1, %s26
      %p32 = scmp.ge.s32.totalorder %s31, 1
      %s33 = scalar_select %p32, 0, %s31
      %s34 = sadd.s32 1, %s25
      %s35 = scalar_select %p32, %s34, %s25
      %p36 = scmp.ge.s32.totalorder %s35, 3
      %s37 = scalar_select %p36, 0, %s35
      %s39 = sadd.s32 %s38, 1
      %p42 = scmp.eq.s32.totalorder %s18, 2
      %p43 = scmp.ne.s32.totalorder %s38, %s40
      %p44 = scmp.eq.s32.totalorder %s18, 0
      %p45 = por %p43, %p44
      %p46 = scmp.ne.s32.totalorder %s38, %s40
      %p47 = scmp.eq.s32.totalorder %s23, 2
      %p48 = por %p46, %p47
      %p49 = scmp.ne.s32.totalorder %s40, %s41
      %p50 = scmp.eq.s32.totalorder %s23, 0
      %p51 = por %p49, %p50
      %p52 = scmp.ne.s32.totalorder %s40, %s41
      %p53 = scmp.eq.s32.totalorder %s24, 2
      %p54 = por %p52, %p53
      %p56 = scmp.ne.s32.totalorder %s41, %s55
      %p57 = scmp.eq.s32.totalorder %s24, 0
      %p58 = por %p56, %p57
      %s60 = sadd.s32 %s59, 1
      %p63 = scmp.eq.s32.totalorder %s18, 2
      %p64 = scmp.ne.s32.totalorder %s59, %s61
      %p65 = scmp.eq.s32.totalorder %s18, 0
      %p66 = por %p64, %p65
      %p67 = scmp.ne.s32.totalorder %s59, %s61
      %p68 = scmp.eq.s32.totalorder %s23, 2
      %p69 = por %p67, %p68
      %p70 = scmp.ne.s32.totalorder %s61, %s62
      %p71 = scmp.eq.s32.totalorder %s23, 0
      %p72 = por %p70, %p71
      %p73 = scmp.ne.s32.totalorder %s61, %s62
      %p74 = scmp.eq.s32.totalorder %s24, 2
      %p75 = por %p73, %p74
      %p77 = scmp.ne.s32.totalorder %s62, %s76
      %p78 = scmp.eq.s32.totalorder %s24, 0
      %p79 = por %p77, %p78
      %s80 = ssub.s32 %s25, %s37
      %p81 = scmp.eq.s32.totalorder %s80, 0
      %s83 = sadd.s32 %s82, 1
      %s84 = scalar_select %p81, %s82, %s83
      %p87 = pneg %p81
      %p88 = scmp.eq.s32.totalorder %s18, 2
      %p89 = por %p87, %p88
      %p90 = scmp.ne.s32.totalorder %s82, %s85
      %p91 = scmp.eq.s32.totalorder %s18, 0
      %p92 = por %p90, %p91
      %p93 = scmp.ne.s32.totalorder %s82, %s85
      %p94 = scmp.eq.s32.totalorder %s23, 2
      %p95 = por %p93, %p94
      %p96 = scmp.ne.s32.totalorder %s85, %s86
      %p97 = scmp.eq.s32.totalorder %s23, 0
      %p98 = por %p96, %p97
      %p99 = scmp.ne.s32.totalorder %s85, %s86
      %p100 = scmp.eq.s32.totalorder %s24, 2
      %p101 = por %p99, %p100
      %p103 = scmp.ne.s32.totalorder %s86, %s102
      %p104 = scmp.eq.s32.totalorder %s24, 0
      %p105 = por %p103, %p104
      %s106 = ssub.s32 %s26, %s33
      %p107 = scmp.eq.s32.totalorder %s106, 0
      %s109 = sadd.s32 %s108, 1
      %s110 = scalar_select %p107, %s108, %s109
      %p113 = pneg %p107
      %p114 = scmp.eq.s32.totalorder %s18, 2
      %p115 = por %p113, %p114
      %p116 = scmp.ne.s32.totalorder %s108, %s111
      %p117 = scmp.eq.s32.totalorder %s18, 0
      %p118 = por %p116, %p117
      %p119 = scmp.ne.s32.totalorder %s108, %s111
      %p120 = scmp.eq.s32.totalorder %s23, 2
      %p121 = por %p119, %p120
      %p122 = scmp.ne.s32.totalorder %s111, %s112
      %p123 = scmp.eq.s32.totalorder %s23, 0
      %p124 = por %p122, %p123
      %p125 = scmp.ne.s32.totalorder %s111, %s112
      %p126 = scmp.eq.s32.totalorder %s24, 2
      %p127 = por %p125, %p126
      %p129 = scmp.ne.s32.totalorder %s112, %s128
      %p130 = scmp.eq.s32.totalorder %s24, 0
      %p131 = por %p129, %p130
      %s133 = sadd.s32 %s132, 1
      %p136 = scmp.eq.s32.totalorder %s18, 2
      %p137 = scmp.ne.s32.totalorder %s132, %s134
      %p138 = scmp.eq.s32.totalorder %s18, 0
      %p139 = por %p137, %p138
      %p140 = scmp.ne.s32.totalorder %s132, %s134
      %p141 = scmp.eq.s32.totalorder %s23, 2
      %p142 = por %p140, %p141
      %p143 = scmp.ne.s32.totalorder %s134, %s135
      %p144 = scmp.eq.s32.totalorder %s23, 0
      %p145 = por %p143, %p144
      %p146 = scmp.ne.s32.totalorder %s134, %s135
      %p147 = scmp.eq.s32.totalorder %s24, 2
      %p148 = por %p146, %p147
      %p150 = scmp.ne.s32.totalorder %s135, %s149
      %p151 = scmp.eq.s32.totalorder %s24, 0
      %p152 = por %p150, %p151
      %s154 = sadd.s32 %s153, 1
      %p157 = scmp.eq.s32.totalorder %s18, 2
      %p158 = scmp.ne.s32.totalorder %s153, %s155
      %p159 = scmp.eq.s32.totalorder %s18, 0
      %p160 = por %p158, %p159
      %p161 = scmp.ne.s32.totalorder %s153, %s155
      %p162 = scmp.eq.s32.totalorder %s23, 2
      %p163 = por %p161, %p162
      %p164 = scmp.ne.s32.totalorder %s155, %s156
      %p165 = scmp.eq.s32.totalorder %s23, 0
      %p166 = por %p164, %p165
      %p167 = scmp.ne.s32.totalorder %s155, %s156
      %p168 = scmp.eq.s32.totalorder %s24, 2
      %p169 = por %p167, %p168
      %p171 = scmp.ne.s32.totalorder %s156, %s170
      %p172 = scmp.eq.s32.totalorder %s24, 0
      %p173 = por %p171, %p172
      %s174 = ssub.s32 %s25, %s37
      %s175 = ssub.s32 %s26, %s33
      %s176 = sor.u32 %s174, %s175
      %p177 = scmp.eq.s32.totalorder %s176, 0
      %s179 = sadd.s32 %s178, 1
      %s180 = scalar_select %p177, %s178, %s179
      %p183 = pneg %p177
      %p184 = scmp.eq.s32.totalorder %s18, 2
      %p185 = por %p183, %p184
      %p186 = scmp.ne.s32.totalorder %s178, %s181
      %p187 = scmp.eq.s32.totalorder %s18, 0
      %p188 = por %p186, %p187
      %p189 = scmp.ne.s32.totalorder %s178, %s181
      %p190 = scmp.eq.s32.totalorder %s23, 2
      %p191 = por %p189, %p190
      %p192 = scmp.ne.s32.totalorder %s181, %s182
      %p193 = scmp.eq.s32.totalorder %s23, 0
      %p194 = por %p192, %p193
      %p195 = scmp.ne.s32.totalorder %s181, %s182
      %p196 = scmp.eq.s32.totalorder %s24, 2
      %p197 = por %p195, %p196
      %p199 = scmp.ne.s32.totalorder %s182, %s198
      %p200 = scmp.eq.s32.totalorder %s24, 0
      %p201 = por %p199, %p200
      %p202 = scmp.le.s32.totalorder 1, %s18
      %p203 = scmp.lt.s32.totalorder %s18, 4
      %p204 = pnand %p202, %p203
      %p205 = pneg %p204
      // Predicated region
      $region9: #{tpu_custom_call.1} parent=5 // pred_check
        _
      $region10: #{tpu_custom_call.1} parent=5 // pred_check_branch
        %207 = sbr.rel (%p204) target = $region12
      $region11: #{tpu_custom_call.1} parent=5 // pred_region
        %s208 = ssub.s32 %s18, 1
        // Predicated region
        $region13: #{tpu_custom_call.1} parent=11 // pred_check
          %p209 = pneg %p51
        $region14: #{tpu_custom_call.1} parent=11 // pred_check_branch
          %211 = sbr.rel (%p209) target = $region16
        $region15: #{tpu_custom_call.1} parent=11 // pred_region
          %s213 = ssub.s32 16, 16
          %214 = vsyncadd [#allocation4], %s213
          %s216 = sshll.u32 %s0, 4
          %s217 = int_to_ptr.vmem [resolvable:$true] %s216
          %219 = dma.vmem_to_smem %s217, 16, [#allocation2], [#allocation4]
        $region16: #{tpu_custom_call.1} parent=11 // pred_fallthru
          _
        // Predicated region
        $region17: #{tpu_custom_call.1} parent=11 // pred_check
          %p220 = pneg %p72
        $region18: #{tpu_custom_call.1} parent=11 // pred_check_branch
          %222 = sbr.rel (%p220) target = $region20
        $region19: #{tpu_custom_call.1} parent=11 // pred_region
          %s224 = ssub.s32 16, 16
          %225 = vsyncadd [#allocation6], %s224
          %s227 = sshll.u32 %s1, 4
          %s228 = int_to_ptr.vmem [resolvable:$true] %s227
          %230 = dma.vmem_to_smem %s228, 16, [#allocation5], [#allocation6]
        $region20: #{tpu_custom_call.1} parent=11 // pred_fallthru
          _
        // Predicated region
        $region21: #{tpu_custom_call.1} parent=11 // pred_check
          %p231 = pneg %p124
        $region22: #{tpu_custom_call.1} parent=11 // pred_check_branch
          %233 = sbr.rel (%p231) target = $region24
        $region23: #{tpu_custom_call.1} parent=11 // pred_region
          %s234 = smul.u32 8, %s28
          %p235 = scmp.lt.s32.totalorder %s234, 7
          %s236 = scalar_select %p235, %s234, 7
          %s237 = smul.addr %s236, 4
          %s238 = scalar_lea.vmem %s3, %s237
          %s239 = smul.u32 8, %s28
        $region24: #{tpu_custom_call.1} parent=11 // pred_fallthru
          _
        // Predicated region
        $region25: #{tpu_custom_call.1} parent=11 // pred_check
          %p240 = pneg %p145
        $region26: #{tpu_custom_call.1} parent=11 // pred_check_branch
          %242 = sbr.rel (%p240) target = $region28
        $region27: #{tpu_custom_call.1} parent=11 // pred_region
          _
        $region28: #{tpu_custom_call.1} parent=11 // pred_fallthru
          _
        // Predicated region
        $region29: #{tpu_custom_call.1} parent=11 // pred_check
          %p243 = pneg %p166
        $region30: #{tpu_custom_call.1} parent=11 // pred_check_branch
          %245 = sbr.rel (%p243) target = $region32
        $region31: #{tpu_custom_call.1} parent=11 // pred_region
          _
        $region32: #{tpu_custom_call.1} parent=11 // pred_fallthru
          _
      $region12: #{tpu_custom_call.1} parent=5 // pred_fallthru
        _
      %p246 = scmp.lt.s32.totalorder %s18, 3
      // Predicated region
      $region33: #{tpu_custom_call.1} parent=5 // pred_check
        %p247 = pneg %p246
      $region34: #{tpu_custom_call.1} parent=5 // pred_check_branch
        %249 = sbr.rel (%p247) target = $region36
      $region35: #{tpu_custom_call.1} parent=5 // pred_region
        // Predicated region
        $region37: #{tpu_custom_call.1} parent=35 // pred_check
          %p250 = pneg %p92
        $region38: #{tpu_custom_call.1} parent=35 // pred_check_branch
          %252 = sbr.rel (%p250) target = $region40
        $region39: #{tpu_custom_call.1} parent=35 // pred_region
          %p253 = scmp.lt.s32.totalorder %s25, 2
          %s254 = scalar_select %p253, %s25, 2
          %s255 = smul.addr %s254, 3
          %s256 = smul.addr %s255, 4
          %s257 = scalar_lea.vmem %s2, %s256
        $region40: #{tpu_custom_call.1} parent=35 // pred_fallthru
          _
      $region36: #{tpu_custom_call.1} parent=5 // pred_fallthru
        _
      %p258 = scmp.le.s32.totalorder 1, %s18
      %p259 = scmp.lt.s32.totalorder %s18, 4
      %p260 = pnand %p258, %p259
      %p261 = pneg %p260
      // Predicated region
      $region41: #{tpu_custom_call.1} parent=5 // pred_check
        _
      $region42: #{tpu_custom_call.1} parent=5 // pred_check_branch
        %263 = sbr.rel (%p260) target = $region44
      $region43: #{tpu_custom_call.1} parent=5 // pred_region
        %s264 = ssub.s32 %s18, 1
        // Predicated region
        $region45: #{tpu_custom_call.1} parent=43 // pred_check
          %p265 = pneg %p51
        $region46: #{tpu_custom_call.1} parent=43 // pred_check_branch
          %267 = sbr.rel (%p265) target = $region48
        $region47: #{tpu_custom_call.1} parent=43 // pred_region
          %268 = dma.done [#allocation4], 16
        $region48: #{tpu_custom_call.1} parent=43 // pred_fallthru
          _
        // Predicated region
        $region49: #{tpu_custom_call.1} parent=43 // pred_check
          %p269 = pneg %p72
        $region50: #{tpu_custom_call.1} parent=43 // pred_check_branch
          %271 = sbr.rel (%p269) target = $region52
        $region51: #{tpu_custom_call.1} parent=43 // pred_region
          %272 = dma.done [#allocation6], 16
        $region52: #{tpu_custom_call.1} parent=43 // pred_fallthru
          _
        %273 = sfence
        %p274 = pneg %p51
        %p275 = pneg %p48
        %p276 = pneg %p72
        %p277 = pneg %p69
        %p278 = scmp.lt.s32.totalorder %s27, 2
        %s279 = scalar_select %p278, %s27, 2
        %s280 = smul.addr %s279, 3
        %s281 = smul.addr %s280, 4
        %s282 = scalar_lea.vmem %s2, %s281
        %p283 = pneg %p98
        %p284 = pneg %p95
        %s285 = smul.u32 8, %s28
        %p286 = scmp.lt.s32.totalorder %s285, 7
        %s287 = scalar_select %p286, %s285, 7
        %s288 = smul.addr %s287, 4
        %s289 = scalar_lea.vmem %s3, %s288
        %p290 = pneg %p124
        %p291 = pneg %p121
        %p292 = pneg %p145
        %p293 = pneg %p142
        %p294 = pneg %p166
        %p295 = pneg %p163
        %p296 = pneg %p194
        %p297 = pneg %p191
        %s298 = sand.u32 %s181, 1
        %s299 = scalar_lea.sflag [#allocation3], %s298
        %s300 = sand.u32 %s181, 1
        %s301 = smul.addr %s300, 64
        %s302 = scalar_lea.vmem [#allocation7], %s301
        %p303 = scmp.lt.s32.totalorder %s27, 2
        %s304 = scalar_select %p303, %s27, 2
        %s305 = smul.addr %s304, 3
        %s306 = smul.addr %s305, 4
        %s307 = scalar_lea.vmem %s2, %s306
        %s308 = smul.u32 8, %s28
        %p309 = scmp.lt.s32.totalorder %s308, 7
        %s310 = scalar_select %p309, %s308, 7
        %s311 = smul.addr %s310, 4
        %s312 = scalar_lea.vmem %s3, %s311
        %s313 = smul.u32 8, %s28
        %s314 = smul.u32 8, %s28
        %s316 = smul.u32 %s28, 64
        %p317 = scmp.lt.s32.totalorder %s316, 32
        // Predicated region
        $region53: #{tpu_custom_call.1} parent=43 // pred_check
          %p318 = pneg %p317
        $region54: #{tpu_custom_call.1} parent=43 // pred_check_branch
          %320 = sbr.rel (%p318) target = $region56
        $region55: #{tpu_custom_call.1} parent=43 // pred_region
          %v321 = vld [vmem:[%s312] sm:$0xf]
          %v322 = vld [vmem:[%s312 + $0x4] sm:$0xf]
          %v323 = vld [vmem:[%s312 + $0x8] sm:$0xf]
          %v324 = vld [vmem:[%s312 + $0xc] sm:$0xf]
          %v325 = vld [vmem:[%s312 + $0x10] sm:$0xf]
          %v326 = vld [vmem:[%s312 + $0x14] sm:$0xf]
          %v327 = vld [vmem:[%s312 + $0x18] sm:$0xf]
          %v328 = vld [vmem:[%s312 + $0x1c] sm:$0xf]
          %v329 = vld [vmem:[%s307] sm:$0xf]
          %v330 = vld [vmem:[%s307 + $0x4] sm:$0xf]
          %v331 = vld [vmem:[%s307 + $0x8] sm:$0x3]
          %v340 = vunpack.c.l.b16 %v321
          %v341 = vunpack.c.l.b16 %v322
          %v342 = vunpack.c.l.b16 %v323
          %v343 = vunpack.c.l.b16 %v324
          %v344 = vunpack.c.l.b16 %v325
          %v345 = vunpack.c.l.b16 %v326
          %v346 = vunpack.c.l.b16 %v327
          %v347 = vunpack.c.l.b16 %v328
          %v348 = vpack.c.b16 %v341, %v340
          %v349 = vpack.c.b16 %v343, %v342
          %v350 = vpack.c.b16 %v345, %v344
          %v351 = vpack.c.b16 %v347, %v346
          %v355 = vunpack.c.l.b16 %v329
          %v356 = vunpack.c.l.b16 %v330
          %v357 = vunpack.c.l.b16 %v331
          %v358 = vpack.c.b16 %v356, %v355
          %v359 = vpack.c.b16 %v357, %v357
          %vm361 = vcmask 162816
          %v363 = vsel %vm361, %v348, 0
          %v366 = vsel %vm361, %v349, 0
          %v369 = vsel %vm361, %v350, 0
          %v372 = vsel %vm361, %v351, 0
          %vm374 = vcmask 1041408
          %v376 = vsel %vm374, %v359, 0
          %378 = vmatprep.subr.bf16.mxu0 0
          %379 = vmatpush1.bf16.msra.mxu0 0
          %380 = vmatprep.subr.bf16.mxu0 0
          %381 = vmatpush1.bf16.msra.mxu0 0
          %382 = vmatprep.subr.bf16.mxu0 0
          %383 = vmatpush1.bf16.msra.mxu0 0
          %384 = vmatprep.subr.bf16.mxu0 0
          %385 = vmatpush1.bf16.msra.mxu0 0
          %386 = vmatprep.subr.bf16.mxu0 0
          %387 = vmatpush1.bf16.msra.mxu0 0
          %388 = vmatprep.subr.bf16.mxu0 0
          %389 = vmatpush1.bf16.msra.mxu0 0
          %390 = vmatprep.subr.bf16.mxu0 0
          %391 = vmatpush1.bf16.msra.mxu0 %v376
          %392 = vmatprep.subr.bf16.mxu0 0
          %393 = vmatpush1.bf16.msra.mxu0 %v358
          %394 = vmatprep.subr.bf16.mxu0 0
          %395 = vmatpush2.bf16.msra.mxu0 0
          %396 = vmatprep.subr.bf16.mxu0 0
          %397 = vmatpush2.bf16.msra.mxu0 0
          %398 = vmatprep.subr.bf16.mxu0 0
          %399 = vmatpush2.bf16.msra.mxu0 0
          %400 = vmatprep.subr.bf16.mxu0 0
          %401 = vmatpush2.bf16.msra.mxu0 0
          %402 = vmatprep.subr.bf16.mxu0 0
          %403 = vmatpush2.bf16.msra.mxu0 0
          %404 = vmatprep.subr.bf16.mxu0 0
          %405 = vmatpush2.bf16.msra.mxu0 0
          %406 = vmatprep.subr.bf16.mxu0 0
          %407 = vmatpush2.bf16.msra.mxu0 0
          %408 = vmatprep.subr.bf16.mxu0 0
          %409 = vmatpush2.bf16.msra.mxu0 0
          %410 = vmatprep.mubr.bf16.mxu0 0
          %411 = vmatmul.mubr.bf16.gmra.mxu0 %v363
          %v412 = vpop.f32.mrf.mxu0
          %v413 = vadd.f32 0.0, %v412
          %v414 = vpop.f32.mrf.mxu0
          %v415 = vpop.f32.mrf.mxu0
          %v416 = vadd.f32 0.0, %v415
          %v417 = vpop.f32.mrf.mxu0
          %418 = vmatprep.mubr.bf16.mxu0 0
          %419 = vmatmul.mubr.bf16.gmra.mxu0 %v366
          %v420 = vpop.f32.mrf.mxu0
          %v421 = vadd.f32 0.0, %v420
          %v422 = vpop.f32.mrf.mxu0
          %v423 = vpop.f32.mrf.mxu0
          %v424 = vadd.f32 0.0, %v423
          %v425 = vpop.f32.mrf.mxu0
          %426 = vmatprep.mubr.bf16.mxu0 0
          %427 = vmatmul.mubr.bf16.gmra.mxu0 %v369
          %v428 = vpop.f32.mrf.mxu0
          %v429 = vadd.f32 0.0, %v428
          %v430 = vpop.f32.mrf.mxu0
          %v431 = vpop.f32.mrf.mxu0
          %v432 = vadd.f32 0.0, %v431
          %v433 = vpop.f32.mrf.mxu0
          %434 = vmatprep.mubr.bf16.mxu0 0
          %435 = vmatmul.mubr.bf16.gmra.mxu0 %v372
          %v436 = vpop.f32.mrf.mxu0
          %v437 = vadd.f32 0.0, %v436
          %v438 = vpop.f32.mrf.mxu0
          %v439 = vpop.f32.mrf.mxu0
          %v440 = vadd.f32 0.0, %v439
          %v441 = vpop.f32.mrf.mxu0
          %442 = vdwg.mxu0
          %v443 = vpack.c.bf16 %v416, %v413
          %v444 = vpack.c.bf16 %v424, %v421
          %v445 = vpack.c.bf16 %v432, %v429
          %v446 = vpack.c.bf16 %v440, %v437
          %v447 = vld [vmem:[%s4] sm:$0xf]
          %v448 = vld [vmem:[%s4 + $0x4] sm:$0xf]
          %v449 = vld [vmem:[%s4 + $0x8] sm:$0xf]
          %v453 = vunpack.c.l.b16 %v447
          %v454 = vunpack.c.l.b16 %v448
          %v455 = vunpack.c.l.b16 %v449
          %v456 = vpack.c.b16 %v454, %v453
          %v457 = vpack.c.b16 %v455, %v455
          %vm459 = vcmask 195584
          %v461 = vsel %vm459, %v443, 0
          %v464 = vsel %vm459, %v444, 0
          %v467 = vsel %vm459, %v445, 0
          %v470 = vsel %vm459, %v446, 0
          %vm472 = vcmask 1043456
          %v474 = vsel %vm472, %v457, 0
          %476 = vmatprep.subr.bf16.mxu0 0
          %477 = vmatpush1.bf16.msra.mxu0 0
          %478 = vmatprep.subr.bf16.mxu0 0
          %479 = vmatpush1.bf16.msra.mxu0 0
          %480 = vmatprep.subr.bf16.mxu0 0
          %481 = vmatpush1.bf16.msra.mxu0 0
          %482 = vmatprep.subr.bf16.mxu0 0
          %483 = vmatpush1.bf16.msra.mxu0 0
          %484 = vmatprep.subr.bf16.mxu0 0
          %485 = vmatpush1.bf16.msra.mxu0 0
          %486 = vmatprep.subr.bf16.mxu0 0
          %487 = vmatpush1.bf16.msra.mxu0 0
          %488 = vmatprep.subr.bf16.mxu0 0
          %489 = vmatpush1.bf16.msra.mxu0 %v474
          %490 = vmatprep.subr.bf16.mxu0 0
          %491 = vmatpush1.bf16.msra.mxu0 %v456
          %492 = vmatprep.subr.bf16.mxu0 0
          %493 = vmatpush2.bf16.msra.mxu0 0
          %494 = vmatprep.subr.bf16.mxu0 0
          %495 = vmatpush2.bf16.msra.mxu0 0
          %496 = vmatprep.subr.bf16.mxu0 0
          %497 = vmatpush2.bf16.msra.mxu0 0
          %498 = vmatprep.subr.bf16.mxu0 0
          %499 = vmatpush2.bf16.msra.mxu0 0
          %500 = vmatprep.subr.bf16.mxu0 0
          %501 = vmatpush2.bf16.msra.mxu0 0
          %502 = vmatprep.subr.bf16.mxu0 0
          %503 = vmatpush2.bf16.msra.mxu0 0
          %504 = vmatprep.subr.bf16.mxu0 0
          %505 = vmatpush2.bf16.msra.mxu0 0
          %506 = vmatprep.subr.bf16.mxu0 0
          %507 = vmatpush2.bf16.msra.mxu0 0
          %508 = vmatprep.mubr.bf16.mxu0 0
          %509 = vmatmul.mubr.bf16.gmra.mxu0 %v461
          %v510 = vpop.f32.mrf.mxu0
          %v511 = vadd.f32 0.0, %v510
          %v512 = vpop.f32.mrf.mxu0
          %v513 = vpop.f32.mrf.mxu0
          %v514 = vadd.f32 0.0, %v513
          %v515 = vpop.f32.mrf.mxu0
          %516 = vmatprep.mubr.bf16.mxu0 0
          %517 = vmatmul.mubr.bf16.gmra.mxu0 %v464
          %v518 = vpop.f32.mrf.mxu0
          %v519 = vadd.f32 0.0, %v518
          %v520 = vpop.f32.mrf.mxu0
          %v521 = vpop.f32.mrf.mxu0
          %v522 = vadd.f32 0.0, %v521
          %v523 = vpop.f32.mrf.mxu0
          %524 = vmatprep.mubr.bf16.mxu0 0
          %525 = vmatmul.mubr.bf16.gmra.mxu0 %v467
          %v526 = vpop.f32.mrf.mxu0
          %v527 = vadd.f32 0.0, %v526
          %v528 = vpop.f32.mrf.mxu0
          %v529 = vpop.f32.mrf.mxu0
          %v530 = vadd.f32 0.0, %v529
          %v531 = vpop.f32.mrf.mxu0
          %532 = vmatprep.mubr.bf16.mxu0 0
          %533 = vmatmul.mubr.bf16.gmra.mxu0 %v470
          %v534 = vpop.f32.mrf.mxu0
          %v535 = vadd.f32 0.0, %v534
          %v536 = vpop.f32.mrf.mxu0
          %v537 = vpop.f32.mrf.mxu0
          %v538 = vadd.f32 0.0, %v537
          %v539 = vpop.f32.mrf.mxu0
          %540 = vdwg.mxu0
          %s541 = sld [smem:[#allocation2 + %s27]]
          %s542 = sld [smem:[#allocation5 + %s27]]
          %s543 = sadd.s32 %s316, 64
          %p544 = scmp.le.s32.totalorder %s543, 32
          // Predicated region
          $region57: #{tpu_custom_call.1} parent=55 // pred_check
            %p545 = pneg %p544
          $region58: #{tpu_custom_call.1} parent=55 // pred_check_branch
            %547 = sbr.rel (%p545) target = $region60
          $region59: #{tpu_custom_call.1} parent=55 // pred_region
            %v548 = vstv %s541
            %v549 = vmul.f32 %v548, %v511
            %v550 = vmul.f32 %v548, %v514
            %v551 = vmul.f32 %v548, %v519
            %v552 = vmul.f32 %v548, %v522
            %v553 = vmul.f32 %v548, %v527
            %v554 = vmul.f32 %v548, %v530
            %v555 = vmul.f32 %v548, %v535
            %v556 = vmul.f32 %v548, %v538
            %v557 = vld [vmem:[%s5] sm:$0x1]
            %v558 = vstv %s542
            %v559 = vmul.f32 %v558, %v557
            %v561 = vlaneseq
            %v562 = vshrl.u32 %v561, 7
            %v563 = vsub.s32 0, %v562
            %v564 = vrot.slane %v559, %v563
            %v566 = vsub.f32 %v549, %v564
            %v567 = vsub.f32 %v550, %v564
            %v568 = vsub.f32 %v551, %v564
            %v569 = vsub.f32 %v552, %v564
            %v570 = vsub.f32 %v553, %v564
            %v571 = vsub.f32 %v554, %v564
            %v572 = vsub.f32 %v555, %v564
            %v573 = vsub.f32 %v556, %v564
            %vm574 = vcmask 523264
            %575 = vst.msk [vmem:[%s302] sm:$0xff] %vm574, %v566
            %576 = vst.msk [vmem:[%s302 + $0x8] sm:$0xff] %vm574, %v567
            %577 = vst.msk [vmem:[%s302 + $0x10] sm:$0xff] %vm574, %v568
            %578 = vst.msk [vmem:[%s302 + $0x18] sm:$0xff] %vm574, %v569
            %579 = vst.msk [vmem:[%s302 + $0x20] sm:$0xff] %vm574, %v570
            %580 = vst.msk [vmem:[%s302 + $0x28] sm:$0xff] %vm574, %v571
            %581 = vst.msk [vmem:[%s302 + $0x30] sm:$0xff] %vm574, %v572
            %582 = vst.msk [vmem:[%s302 + $0x38] sm:$0xff] %vm574, %v573
          $region60: #{tpu_custom_call.1} parent=55 // pred_fallthru
            _
          %p583 = scmp.gt.s32.totalorder %s543, 32
          // Predicated region
          $region61: #{tpu_custom_call.1} parent=55 // pred_check
            %p584 = pneg %p583
          $region62: #{tpu_custom_call.1} parent=55 // pred_check_branch
            %586 = sbr.rel (%p584) target = $region64
          $region63: #{tpu_custom_call.1} parent=55 // pred_region
            %v587 = vlaneseq
            %v588 = vshrl.u32 %v587, 7
            %v589 = vadd.s32 %v588, 8
            %v590 = vadd.s32 %v588, 16
            %v591 = vadd.s32 %v588, 24
            %v592 = vadd.s32 %v588, 32
            %v593 = vadd.s32 %v588, 40
            %v594 = vadd.s32 %v588, 48
            %v595 = vadd.s32 %v588, 56
            %v596 = vstv %s316
            %v597 = vadd.s32 %v588, %v596
            %v598 = vadd.s32 %v589, %v596
            %v599 = vadd.s32 %v590, %v596
            %v600 = vadd.s32 %v591, %v596
            %v601 = vadd.s32 %v592, %v596
            %v602 = vadd.s32 %v593, %v596
            %v603 = vadd.s32 %v594, %v596
            %v604 = vadd.s32 %v595, %v596
            %vm605 = vcmp.lt.s32.totalorder %v597, 32
            %vm606 = vcmp.lt.s32.totalorder %v598, 32
            %vm607 = vcmp.lt.s32.totalorder %v599, 32
            %vm608 = vcmp.lt.s32.totalorder %v600, 32
            %vm609 = vcmp.lt.s32.totalorder %v601, 32
            %vm610 = vcmp.lt.s32.totalorder %v602, 32
            %vm611 = vcmp.lt.s32.totalorder %v603, 32
            %vm612 = vcmp.lt.s32.totalorder %v604, 32
            %v613 = vsel %vm605, 1, 0
            %v614 = vsel %vm606, 1, 0
            %v615 = vsel %vm607, 1, 0
            %v616 = vsel %vm608, 1, 0
            %v617 = vsel %vm609, 1, 0
            %v618 = vsel %vm610, 1, 0
            %v619 = vsel %vm611, 1, 0
            %v620 = vsel %vm612, 1, 0
            %v621 = vcvt.s32.f32 %v613
            %v622 = vcvt.s32.f32 %v614
            %v623 = vcvt.s32.f32 %v615
            %v624 = vcvt.s32.f32 %v616
            %v625 = vcvt.s32.f32 %v617
            %v626 = vcvt.s32.f32 %v618
            %v627 = vcvt.s32.f32 %v619
            %v628 = vcvt.s32.f32 %v620
            %v629 = vstv %s541
            %v630 = vmul.f32 %v629, %v511
            %v631 = vmul.f32 %v629, %v514
            %v632 = vmul.f32 %v629, %v519
            %v633 = vmul.f32 %v629, %v522
            %v634 = vmul.f32 %v629, %v527
            %v635 = vmul.f32 %v629, %v530
            %v636 = vmul.f32 %v629, %v535
            %v637 = vmul.f32 %v629, %v538
            %v638 = vld [vmem:[%s5] sm:$0x1]
            %v640 = vlaneseq
            %v641 = vshrl.u32 %v640, 7
            %v642 = vsub.s32 0, %v641
            %v643 = vrot.slane %v638, %v642
            %v645 = vmul.f32 %v621, %v643
            %v646 = vmul.f32 %v622, %v643
            %v647 = vmul.f32 %v623, %v643
            %v648 = vmul.f32 %v624, %v643
            %v649 = vmul.f32 %v625, %v643
            %v650 = vmul.f32 %v626, %v643
            %v651 = vmul.f32 %v627, %v643
            %v652 = vmul.f32 %v628, %v643
            %v653 = vstv %s542
            %v654 = vmul.f32 %v653, %v645
            %v655 = vmul.f32 %v653, %v646
            %v656 = vmul.f32 %v653, %v647
            %v657 = vmul.f32 %v653, %v648
            %v658 = vmul.f32 %v653, %v649
            %v659 = vmul.f32 %v653, %v650
            %v660 = vmul.f32 %v653, %v651
            %v661 = vmul.f32 %v653, %v652
            %v662 = vsub.f32 %v630, %v654
            %v663 = vsub.f32 %v631, %v655
            %v664 = vsub.f32 %v632, %v656
            %v665 = vsub.f32 %v633, %v657
            %v666 = vsub.f32 %v634, %v658
            %v667 = vsub.f32 %v635, %v659
            %v668 = vsub.f32 %v636, %v660
            %v669 = vsub.f32 %v637, %v661
            %vm670 = vcmask 523264
            %671 = vst.msk [vmem:[%s302] sm:$0xff] %vm670, %v662
            %672 = vst.msk [vmem:[%s302 + $0x8] sm:$0xff] %vm670, %v663
            %673 = vst.msk [vmem:[%s302 + $0x10] sm:$0xff] %vm670, %v664
            %674 = vst.msk [vmem:[%s302 + $0x18] sm:$0xff] %vm670, %v665
            %675 = vst.msk [vmem:[%s302 + $0x20] sm:$0xff] %vm670, %v666
            %676 = vst.msk [vmem:[%s302 + $0x28] sm:$0xff] %vm670, %v667
            %677 = vst.msk [vmem:[%s302 + $0x30] sm:$0xff] %vm670, %v668
            %678 = vst.msk [vmem:[%s302 + $0x38] sm:$0xff] %vm670, %v669
          $region64: #{tpu_custom_call.1} parent=55 // pred_fallthru
            _
        $region56: #{tpu_custom_call.1} parent=43 // pred_fallthru
          _
        %p679 = scmp.ge.s32.totalorder %s316, 32
        // Predicated region
        $region65: #{tpu_custom_call.1} parent=43 // pred_check
          %p680 = pneg %p679
        $region66: #{tpu_custom_call.1} parent=43 // pred_check_branch
          %682 = sbr.rel (%p680) target = $region68
        $region67: #{tpu_custom_call.1} parent=43 // pred_region
          %vm683 = vcmask 523264
          %684 = vst.msk [vmem:[%s302] sm:$0xff] %vm683, 0.0
          %685 = vst.msk [vmem:[%s302 + $0x8] sm:$0xff] %vm683, 0.0
          %686 = vst.msk [vmem:[%s302 + $0x10] sm:$0xff] %vm683, 0.0
          %687 = vst.msk [vmem:[%s302 + $0x18] sm:$0xff] %vm683, 0.0
          %688 = vst.msk [vmem:[%s302 + $0x20] sm:$0xff] %vm683, 0.0
          %689 = vst.msk [vmem:[%s302 + $0x28] sm:$0xff] %vm683, 0.0
          %690 = vst.msk [vmem:[%s302 + $0x30] sm:$0xff] %vm683, 0.0
          %691 = vst.msk [vmem:[%s302 + $0x38] sm:$0xff] %vm683, 0.0
        $region68: #{tpu_custom_call.1} parent=43 // pred_fallthru
          _
        %s692 = sand.u32 %s181, 1
        %s693 = scalar_lea.sflag [#allocation3], %s692
        %s694 = sand.u32 %s181, 1
        %s695 = smul.addr %s694, 64
        %s696 = scalar_lea.vmem [#allocation7], %s695
        // Predicated region
        $region69: #{tpu_custom_call.1} parent=43 // pred_check
          %p697 = pneg %p191
        $region70: #{tpu_custom_call.1} parent=43 // pred_check_branch
          %699 = sbr.rel (%p697) target = $region72
        $region71: #{tpu_custom_call.1} parent=43 // pred_region
          %s700 = smul.u32 8, %s28
          %s702 = ssub.s32 1024, 1024
          %703 = vsyncadd %s693, %s702
          %s704 = smul.addr %s27, 8
          %s705 = sadd.s32 %s700, %s704
          %s706 = smul.addr %s705, 128
          %s707 = scalar_lea.hbm %s7, %s706
          %s708 = sshll.u32 %s696, 4
          %s709 = int_to_ptr.vmem [resolvable:$true] %s708
          %714 = dma.vmem_to_hbm [thread:$0]  %s709, 1024, %s707, %s693, 128, 128, 8
        $region72: #{tpu_custom_call.1} parent=43 // pred_fallthru
          _
      $region44: #{tpu_custom_call.1} parent=5 // pred_fallthru
        _
      %p715 = scmp.le.s32.totalorder 2, %s18
      // Predicated region
      $region73: #{tpu_custom_call.1} parent=5 // pred_check
        %p716 = pneg %p715
      $region74: #{tpu_custom_call.1} parent=5 // pred_check_branch
        %718 = sbr.rel (%p716) target = $region76
      $region75: #{tpu_custom_call.1} parent=5 // pred_region
        %s719 = ssub.s32 %s18, 2
        // Predicated region
        $region77: #{tpu_custom_call.1} parent=75 // pred_check
          %p720 = pneg %p197
        $region78: #{tpu_custom_call.1} parent=75 // pred_check_branch
          %722 = sbr.rel (%p720) target = $region80
        $region79: #{tpu_custom_call.1} parent=75 // pred_region
          %s723 = sand.u32 %s182, 1
          %s724 = scalar_lea.sflag [#allocation3], %s723
          %s725 = sand.u32 %s182, 1
          %s726 = smul.addr %s725, 64
          %s727 = scalar_lea.vmem [#allocation7], %s726
          %728 = dma.done %s724, 1024
        $region80: #{tpu_custom_call.1} parent=75 // pred_fallthru
          _
      $region76: #{tpu_custom_call.1} parent=5 // pred_fallthru
        _
    $region6: #{tpu_custom_call.1} parent=1 // loop_footer
      %s22 = sadd.s32 1, %s18
    $region7: #{tpu_custom_call.1} parent=1 // loop_footer_branch
      %17 = sbr.rel target = $region3
    $region8: #{tpu_custom_call.1} parent=1 // loop_exit
      _
    %729 = vsyncpa [#allocation3], 1
    %s730 = scalar_lea.sflag [#allocation3], 1
    %731 = vsyncpa %s730, 1
    %732 = vsyncpa [#allocation4], 1
    %s733 = scalar_lea.sflag [#allocation4], 1
    %734 = vsyncpa %s733, 1
    %735 = vsyncpa [#allocation6], 1

// kernel: tpu_custom_call.1
$region0: #{tpu_custom_call.1}
  #allocation0 [shape = 'u32[]', space=smem, size = 0x4, offset = 0x4, fixed_abs, tag = 'smem constant byte address 0x4 - core index']
  #allocation1 [shape = 'u32[144,128]{1,0:T(1,128)}', space=vmem, size = 0x12000, scoped, tag = 'internal scratch']
  %s0 = inlined_call_operand.vmem [shape: f32[3], index: 0, kind: input, shape index: {}]
  %s1 = inlined_call_operand.vmem [shape: f32[3], index: 1, kind: input, shape index: {}]
  %s2 = inlined_call_operand.vmem [shape: bf16[3,20,24], index: 2, kind: input, shape index: {}]
  %s3 = inlined_call_operand.vmem [shape: bf16[64,20], index: 3, kind: input, shape index: {}]
  %s4 = inlined_call_operand.vmem [shape: bf16[24,64], index: 4, kind: input, shape index: {}]
  %s5 = inlined_call_operand.vmem [shape: f32[1,64], index: 5, kind: input, shape index: {}]
  %s6 = inlined_call_operand.hbm [shape: f32[2,3,64,64], index: 6, kind: input, shape index: {}, may-alias: {6,7}]
  %s7 = inlined_call_operand.hbm [shape: f32[2,3,64,64], index: 7, kind: output, shape index: {}, may-alias: {6,7}]
  %s8 = sld [smem:[#allocation0]]
  $region81: #{tpu_custom_call.1} parent=0
    _
  %s10 = ssub.s32 1, %s8
  %s11 = scalar_select 0, %s10, %s8
  $region1: #{tpu_custom_call.1} parent=0
    #allocation2 [shape = 'u8[512]{0}', space=smem, size = 0x200, scoped, tag = 'input window, operand 0, single buffered']
    #allocation3 [shape = 's32[2]{0}', space=sflag, size = 0x8, scoped, tag = 'scoped memory for tpu_custom_call.1']
    #allocation4 [shape = 's32[2]{0}', space=sflag, size = 0x8, scoped, tag = 'scoped memory for tpu_custom_call.1']
    #allocation5 [shape = 'u8[512]{0}', space=smem, size = 0x200, scoped, tag = 'input window, operand 1, single buffered']
    #allocation6 [shape = 's32[1]{0}', space=sflag, size = 0x4, scoped, tag = 'scoped memory for tpu_custom_call.1']
    #allocation7 [shape = 'u8[65536]{0}', space=vmem, size = 0x10000, scoped, tag = 'output window, operand 0']
    %12 = vsyncpa [#allocation4], 0
    %13 = vsyncpa [#allocation6], 0
    %14 = vsyncpa [#allocation3], 0
    %s15 = scalar_lea.sflag [#allocation3], 1
    %16 = vsyncpa %s15, 0
    loop: start=0, step=1, limit=5
    $region2: #{tpu_custom_call.1} parent=1 // loop_pre_header
      _
    $region3: #{tpu_custom_call.1} parent=1 // loop_header
      %s18 = sphi 0, %s22
      %p19 = scmp.ge.s32.totalorder %s18, 5
      %s25 = sphi 0, %s37
      %s26 = sphi 0, %s33
      %s27 = sphi 0, %s25
      %s28 = sphi 0, %s26
      %s29 = sphi 0, %s27
      %s30 = sphi 0, %s28
      %s38 = sphi 0, %s38
      %s40 = sphi 0, %s38
      %s41 = sphi 0, %s40
      %s55 = sphi 0, %s41
      %s59 = sphi 0, %s59
      %s61 = sphi 0, %s59
      %s62 = sphi 0, %s61
      %s76 = sphi 0, %s62
      %s82 = sphi 0, %s84
      %s85 = sphi 0, %s82
      %s86 = sphi 0, %s85
      %s102 = sphi 0, %s86
      %s108 = sphi 0, %s110
      %s111 = sphi 0, %s108
      %s112 = sphi 0, %s111
      %s128 = sphi 0, %s112
      %s132 = sphi 0, %s132
      %s134 = sphi 0, %s132
      %s135 = sphi 0, %s134
      %s149 = sphi 0, %s135
      %s153 = sphi 0, %s153
      %s155 = sphi 0, %s153
      %s156 = sphi 0, %s155
      %s170 = sphi 0, %s156
      %s178 = sphi 0, %s180
      %s181 = sphi 0, %s178
      %s182 = sphi 0, %s181
      %s198 = sphi 0, %s182
    $region4: #{tpu_custom_call.1} parent=1 // loop_header_branch
      %21 = sbr.rel (%p19) target = $region8
    $region5: #{tpu_custom_call.1} parent=1 // loop_body
      %s23 = ssub.s32 %s18, 1
      %s24 = ssub.s32 %s18, 2
      %s31 = sadd.s32 1, %s26
      %p32 = scmp.ge.s32.totalorder %s31, 1
      %s33 = scalar_select %p32, 0, %s31
      %s34 = sadd.s32 1, %s25
      %s35 = scalar_select %p32, %s34, %s25
      %p36 = scmp.ge.s32.totalorder %s35, 3
      %s37 = scalar_select %p36, 0, %s35
      %s39 = sadd.s32 %s38, 1
      %p42 = scmp.eq.s32.totalorder %s18, 2
      %p43 = scmp.ne.s32.totalorder %s38, %s40
      %p44 = scmp.eq.s32.totalorder %s18, 0
      %p45 = por %p43, %p44
      %p46 = scmp.ne.s32.totalorder %s38, %s40
      %p47 = scmp.eq.s32.totalorder %s23, 2
      %p48 = por %p46, %p47
      %p49 = scmp.ne.s32.totalorder %s40, %s41
      %p50 = scmp.eq.s32.totalorder %s23, 0
      %p51 = por %p49, %p50
      %p52 = scmp.ne.s32.totalorder %s40, %s41
      %p53 = scmp.eq.s32.totalorder %s24, 2
      %p54 = por %p52, %p53
      %p56 = scmp.ne.s32.totalorder %s41, %s55
      %p57 = scmp.eq.s32.totalorder %s24, 0
      %p58 = por %p56, %p57
      %s60 = sadd.s32 %s59, 1
      %p63 = scmp.eq.s32.totalorder %s18, 2
      %p64 = scmp.ne.s32.totalorder %s59, %s61
      %p65 = scmp.eq.s32.totalorder %s18, 0
      %p66 = por %p64, %p65
      %p67 = scmp.ne.s32.totalorder %s59, %s61
      %p68 = scmp.eq.s32.totalorder %s23, 2
      %p69 = por %p67, %p68
      %p70 = scmp.ne.s32.totalorder %s61, %s62
      %p71 = scmp.eq.s32.totalorder %s23, 0
      %p72 = por %p70, %p71
      %p73 = scmp.ne.s32.totalorder %s61, %s62
      %p74 = scmp.eq.s32.totalorder %s24, 2
      %p75 = por %p73, %p74
      %p77 = scmp.ne.s32.totalorder %s62, %s76
      %p78 = scmp.eq.s32.totalorder %s24, 0
      %p79 = por %p77, %p78
      %s80 = ssub.s32 %s25, %s37
      %p81 = scmp.eq.s32.totalorder %s80, 0
      %s83 = sadd.s32 %s82, 1
      %s84 = scalar_select %p81, %s82, %s83
      %p87 = pneg %p81
      %p88 = scmp.eq.s32.totalorder %s18, 2
      %p89 = por %p87, %p88
      %p90 = scmp.ne.s32.totalorder %s82, %s85
      %p91 = scmp.eq.s32.totalorder %s18, 0
      %p92 = por %p90, %p91
      %p93 = scmp.ne.s32.totalorder %s82, %s85
      %p94 = scmp.eq.s32.totalorder %s23, 2
      %p95 = por %p93, %p94
      %p96 = scmp.ne.s32.totalorder %s85, %s86
      %p97 = scmp.eq.s32.totalorder %s23, 0
      %p98 = por %p96, %p97
      %p99 = scmp.ne.s32.totalorder %s85, %s86
      %p100 = scmp.eq.s32.totalorder %s24, 2
      %p101 = por %p99, %p100
      %p103 = scmp.ne.s32.totalorder %s86, %s102
      %p104 = scmp.eq.s32.totalorder %s24, 0
      %p105 = por %p103, %p104
      %s106 = ssub.s32 %s26, %s33
      %p107 = scmp.eq.s32.totalorder %s106, 0
      %s109 = sadd.s32 %s108, 1
      %s110 = scalar_select %p107, %s108, %s109
      %p113 = pneg %p107
      %p114 = scmp.eq.s32.totalorder %s18, 2
      %p115 = por %p113, %p114
      %p116 = scmp.ne.s32.totalorder %s108, %s111
      %p117 = scmp.eq.s32.totalorder %s18, 0
      %p118 = por %p116, %p117
      %p119 = scmp.ne.s32.totalorder %s108, %s111
      %p120 = scmp.eq.s32.totalorder %s23, 2
      %p121 = por %p119, %p120
      %p122 = scmp.ne.s32.totalorder %s111, %s112
      %p123 = scmp.eq.s32.totalorder %s23, 0
      %p124 = por %p122, %p123
      %p125 = scmp.ne.s32.totalorder %s111, %s112
      %p126 = scmp.eq.s32.totalorder %s24, 2
      %p127 = por %p125, %p126
      %p129 = scmp.ne.s32.totalorder %s112, %s128
      %p130 = scmp.eq.s32.totalorder %s24, 0
      %p131 = por %p129, %p130
      %s133 = sadd.s32 %s132, 1
      %p136 = scmp.eq.s32.totalorder %s18, 2
      %p137 = scmp.ne.s32.totalorder %s132, %s134
      %p138 = scmp.eq.s32.totalorder %s18, 0
      %p139 = por %p137, %p138
      %p140 = scmp.ne.s32.totalorder %s132, %s134
      %p141 = scmp.eq.s32.totalorder %s23, 2
      %p142 = por %p140, %p141
      %p143 = scmp.ne.s32.totalorder %s134, %s135
      %p144 = scmp.eq.s32.totalorder %s23, 0
      %p145 = por %p143, %p144
      %p146 = scmp.ne.s32.totalorder %s134, %s135
      %p147 = scmp.eq.s32.totalorder %s24, 2
      %p148 = por %p146, %p147
      %p150 = scmp.ne.s32.totalorder %s135, %s149
      %p151 = scmp.eq.s32.totalorder %s24, 0
      %p152 = por %p150, %p151
      %s154 = sadd.s32 %s153, 1
      %p157 = scmp.eq.s32.totalorder %s18, 2
      %p158 = scmp.ne.s32.totalorder %s153, %s155
      %p159 = scmp.eq.s32.totalorder %s18, 0
      %p160 = por %p158, %p159
      %p161 = scmp.ne.s32.totalorder %s153, %s155
      %p162 = scmp.eq.s32.totalorder %s23, 2
      %p163 = por %p161, %p162
      %p164 = scmp.ne.s32.totalorder %s155, %s156
      %p165 = scmp.eq.s32.totalorder %s23, 0
      %p166 = por %p164, %p165
      %p167 = scmp.ne.s32.totalorder %s155, %s156
      %p168 = scmp.eq.s32.totalorder %s24, 2
      %p169 = por %p167, %p168
      %p171 = scmp.ne.s32.totalorder %s156, %s170
      %p172 = scmp.eq.s32.totalorder %s24, 0
      %p173 = por %p171, %p172
      %s174 = ssub.s32 %s25, %s37
      %s175 = ssub.s32 %s26, %s33
      %s176 = sor.u32 %s174, %s175
      %p177 = scmp.eq.s32.totalorder %s176, 0
      %s179 = sadd.s32 %s178, 1
      %s180 = scalar_select %p177, %s178, %s179
      %p183 = pneg %p177
      %p184 = scmp.eq.s32.totalorder %s18, 2
      %p185 = por %p183, %p184
      %p186 = scmp.ne.s32.totalorder %s178, %s181
      %p187 = scmp.eq.s32.totalorder %s18, 0
      %p188 = por %p186, %p187
      %p189 = scmp.ne.s32.totalorder %s178, %s181
      %p190 = scmp.eq.s32.totalorder %s23, 2
      %p191 = por %p189, %p190
      %p192 = scmp.ne.s32.totalorder %s181, %s182
      %p193 = scmp.eq.s32.totalorder %s23, 0
      %p194 = por %p192, %p193
      %p195 = scmp.ne.s32.totalorder %s181, %s182
      %p196 = scmp.eq.s32.totalorder %s24, 2
      %p197 = por %p195, %p196
      %p199 = scmp.ne.s32.totalorder %s182, %s198
      %p200 = scmp.eq.s32.totalorder %s24, 0
      %p201 = por %p199, %p200
      %p202 = scmp.le.s32.totalorder 1, %s18
      %p203 = scmp.lt.s32.totalorder %s18, 4
      %p204 = pnand %p202, %p203
      %p205 = pneg %p204
      // Predicated region
      $region9: #{tpu_custom_call.1} parent=5 // pred_check
        _
      $region10: #{tpu_custom_call.1} parent=5 // pred_check_branch
        %207 = sbr.rel (%p204) target = $region12
      $region11: #{tpu_custom_call.1} parent=5 // pred_region
        %s208 = ssub.s32 %s18, 1
        // Predicated region
        $region13: #{tpu_custom_call.1} parent=11 // pred_check
          %p209 = pneg %p51
        $region14: #{tpu_custom_call.1} parent=11 // pred_check_branch
          %211 = sbr.rel (%p209) target = $region16
        $region15: #{tpu_custom_call.1} parent=11 // pred_region
          %s213 = ssub.s32 16, 16
          %214 = vsyncadd [#allocation4], %s213
          %s216 = sshll.u32 %s0, 4
          %s217 = int_to_ptr.vmem [resolvable:$true] %s216
          %219 = dma.vmem_to_smem %s217, 16, [#allocation2], [#allocation4]
        $region16: #{tpu_custom_call.1} parent=11 // pred_fallthru
          _
        // Predicated region
        $region17: #{tpu_custom_call.1} parent=11 // pred_check
          %p220 = pneg %p72
        $region18: #{tpu_custom_call.1} parent=11 // pred_check_branch
          %222 = sbr.rel (%p220) target = $region20
        $region19: #{tpu_custom_call.1} parent=11 // pred_region
          %s224 = ssub.s32 16, 16
          %225 = vsyncadd [#allocation6], %s224
          %s227 = sshll.u32 %s1, 4
          %s228 = int_to_ptr.vmem [resolvable:$true] %s227
          %230 = dma.vmem_to_smem %s228, 16, [#allocation5], [#allocation6]
        $region20: #{tpu_custom_call.1} parent=11 // pred_fallthru
          _
        // Predicated region
        $region21: #{tpu_custom_call.1} parent=11 // pred_check
          %p231 = pneg %p124
        $region22: #{tpu_custom_call.1} parent=11 // pred_check_branch
          %233 = sbr.rel (%p231) target = $region24
        $region23: #{tpu_custom_call.1} parent=11 // pred_region
          %s234 = smul.u32 8, %s28
          %p235 = scmp.lt.s32.totalorder %s234, 7
          %s236 = scalar_select %p235, %s234, 7
          %s237 = smul.addr %s236, 4
          %s238 = scalar_lea.vmem %s3, %s237
          %s239 = smul.u32 8, %s28
        $region24: #{tpu_custom_call.1} parent=11 // pred_fallthru
          _
        // Predicated region
        $region25: #{tpu_custom_call.1} parent=11 // pred_check
          %p240 = pneg %p145
        $region26: #{tpu_custom_call.1} parent=11 // pred_check_branch
          %242 = sbr.rel (%p240) target = $region28
        $region27: #{tpu_custom_call.1} parent=11 // pred_region
          _
        $region28: #{tpu_custom_call.1} parent=11 // pred_fallthru
          _
        // Predicated region
        $region29: #{tpu_custom_call.1} parent=11 // pred_check
          %p243 = pneg %p166
        $region30: #{tpu_custom_call.1} parent=11 // pred_check_branch
          %245 = sbr.rel (%p243) target = $region32
        $region31: #{tpu_custom_call.1} parent=11 // pred_region
          _
        $region32: #{tpu_custom_call.1} parent=11 // pred_fallthru
          _
      $region12: #{tpu_custom_call.1} parent=5 // pred_fallthru
        _
      %p246 = scmp.lt.s32.totalorder %s18, 3
      // Predicated region
      $region33: #{tpu_custom_call.1} parent=5 // pred_check
        %p247 = pneg %p246
      $region34: #{tpu_custom_call.1} parent=5 // pred_check_branch
        %249 = sbr.rel (%p247) target = $region36
      $region35: #{tpu_custom_call.1} parent=5 // pred_region
        // Predicated region
        $region37: #{tpu_custom_call.1} parent=35 // pred_check
          %p250 = pneg %p92
        $region38: #{tpu_custom_call.1} parent=35 // pred_check_branch
          %252 = sbr.rel (%p250) target = $region40
        $region39: #{tpu_custom_call.1} parent=35 // pred_region
          %p253 = scmp.lt.s32.totalorder %s25, 2
          %s254 = scalar_select %p253, %s25, 2
          %s255 = smul.addr %s254, 3
          %s256 = smul.addr %s255, 4
          %s257 = scalar_lea.vmem %s2, %s256
        $region40: #{tpu_custom_call.1} parent=35 // pred_fallthru
          _
      $region36: #{tpu_custom_call.1} parent=5 // pred_fallthru
        _
      %p258 = scmp.le.s32.totalorder 1, %s18
      %p259 = scmp.lt.s32.totalorder %s18, 4
      %p260 = pnand %p258, %p259
      %p261 = pneg %p260
      // Predicated region
      $region41: #{tpu_custom_call.1} parent=5 // pred_check
        _
      $region42: #{tpu_custom_call.1} parent=5 // pred_check_branch
        %263 = sbr.rel (%p260) target = $region44
      $region43: #{tpu_custom_call.1} parent=5 // pred_region
        %s264 = ssub.s32 %s18, 1
        // Predicated region
        $region45: #{tpu_custom_call.1} parent=43 // pred_check
          %p265 = pneg %p51
        $region46: #{tpu_custom_call.1} parent=43 // pred_check_branch
          %267 = sbr.rel (%p265) target = $region48
        $region47: #{tpu_custom_call.1} parent=43 // pred_region
          %268 = dma.done [#allocation4], 16
        $region48: #{tpu_custom_call.1} parent=43 // pred_fallthru
          _
        // Predicated region
        $region49: #{tpu_custom_call.1} parent=43 // pred_check
          %p269 = pneg %p72
        $region50: #{tpu_custom_call.1} parent=43 // pred_check_branch
          %271 = sbr.rel (%p269) target = $region52
        $region51: #{tpu_custom_call.1} parent=43 // pred_region
          %272 = dma.done [#allocation6], 16
        $region52: #{tpu_custom_call.1} parent=43 // pred_fallthru
          _
        %273 = sfence
        %p274 = pneg %p51
        %p275 = pneg %p48
        %p276 = pneg %p72
        %p277 = pneg %p69
        %p278 = scmp.lt.s32.totalorder %s27, 2
        %s279 = scalar_select %p278, %s27, 2
        %s280 = smul.addr %s279, 3
        %s281 = smul.addr %s280, 4
        %s282 = scalar_lea.vmem %s2, %s281
        %p283 = pneg %p98
        %p284 = pneg %p95
        %s285 = smul.u32 8, %s28
        %p286 = scmp.lt.s32.totalorder %s285, 7
        %s287 = scalar_select %p286, %s285, 7
        %s288 = smul.addr %s287, 4
        %s289 = scalar_lea.vmem %s3, %s288
        %p290 = pneg %p124
        %p291 = pneg %p121
        %p292 = pneg %p145
        %p293 = pneg %p142
        %p294 = pneg %p166
        %p295 = pneg %p163
        %p296 = pneg %p194
        %p297 = pneg %p191
        %s298 = sand.u32 %s181, 1
        %s299 = scalar_lea.sflag [#allocation3], %s298
        %s300 = sand.u32 %s181, 1
        %s301 = smul.addr %s300, 64
        %s302 = scalar_lea.vmem [#allocation7], %s301
        %p303 = scmp.lt.s32.totalorder %s27, 2
        %s304 = scalar_select %p303, %s27, 2
        %s305 = smul.addr %s304, 3
        %s306 = smul.addr %s305, 4
        %s307 = scalar_lea.vmem %s2, %s306
        %s308 = smul.u32 8, %s28
        %p309 = scmp.lt.s32.totalorder %s308, 7
        %s310 = scalar_select %p309, %s308, 7
        %s311 = smul.addr %s310, 4
        %s312 = scalar_lea.vmem %s3, %s311
        %s313 = smul.u32 8, %s28
        %s314 = smul.u32 8, %s28
        %s316 = smul.u32 %s28, 64
        %p317 = scmp.lt.s32.totalorder %s316, 32
        // Predicated region
        $region53: #{tpu_custom_call.1} parent=43 // pred_check
          %p318 = pneg %p317
        $region54: #{tpu_custom_call.1} parent=43 // pred_check_branch
          %320 = sbr.rel (%p318) target = $region56
        $region55: #{tpu_custom_call.1} parent=43 // pred_region
          %v321 = vld [vmem:[%s312] sm:$0xf]
          %v322 = vld [vmem:[%s312 + $0x4] sm:$0xf]
          %v323 = vld [vmem:[%s312 + $0x8] sm:$0xf]
          %v324 = vld [vmem:[%s312 + $0xc] sm:$0xf]
          %v325 = vld [vmem:[%s312 + $0x10] sm:$0xf]
          %v326 = vld [vmem:[%s312 + $0x14] sm:$0xf]
          %v327 = vld [vmem:[%s312 + $0x18] sm:$0xf]
          %v328 = vld [vmem:[%s312 + $0x1c] sm:$0xf]
          %v329 = vld [vmem:[%s307] sm:$0xf]
          %v330 = vld [vmem:[%s307 + $0x4] sm:$0xf]
          %v331 = vld [vmem:[%s307 + $0x8] sm:$0x3]
          %v340 = vunpack.c.l.b16 %v321
          %v341 = vunpack.c.l.b16 %v322
          %v342 = vunpack.c.l.b16 %v323
          %v343 = vunpack.c.l.b16 %v324
          %v344 = vunpack.c.l.b16 %v325
          %v345 = vunpack.c.l.b16 %v326
          %v346 = vunpack.c.l.b16 %v327
          %v347 = vunpack.c.l.b16 %v328
          %v348 = vpack.c.b16 %v341, %v340
          %v349 = vpack.c.b16 %v343, %v342
          %v350 = vpack.c.b16 %v345, %v344
          %v351 = vpack.c.b16 %v347, %v346
          %v355 = vunpack.c.l.b16 %v329
          %v356 = vunpack.c.l.b16 %v330
          %v357 = vunpack.c.l.b16 %v331
          %v358 = vpack.c.b16 %v356, %v355
          %v359 = vpack.c.b16 %v357, %v357
          %vm361 = vcmask 162816
          %v363 = vsel %vm361, %v348, 0
          %v366 = vsel %vm361, %v349, 0
          %v369 = vsel %vm361, %v350, 0
          %v372 = vsel %vm361, %v351, 0
          %vm374 = vcmask 1041408
          %v376 = vsel %vm374, %v359, 0
          %378 = vmatprep.subr.bf16.mxu0 0
          %379 = vmatpush1.bf16.msra.mxu0 0
          %380 = vmatprep.subr.bf16.mxu0 0
          %381 = vmatpush1.bf16.msra.mxu0 0
          %382 = vmatprep.subr.bf16.mxu0 0
          %383 = vmatpush1.bf16.msra.mxu0 0
          %384 = vmatprep.subr.bf16.mxu0 0
          %385 = vmatpush1.bf16.msra.mxu0 0
          %386 = vmatprep.subr.bf16.mxu0 0
          %387 = vmatpush1.bf16.msra.mxu0 0
          %388 = vmatprep.subr.bf16.mxu0 0
          %389 = vmatpush1.bf16.msra.mxu0 0
          %390 = vmatprep.subr.bf16.mxu0 0
          %391 = vmatpush1.bf16.msra.mxu0 %v376
          %392 = vmatprep.subr.bf16.mxu0 0
          %393 = vmatpush1.bf16.msra.mxu0 %v358
          %394 = vmatprep.subr.bf16.mxu0 0
          %395 = vmatpush2.bf16.msra.mxu0 0
          %396 = vmatprep.subr.bf16.mxu0 0
          %397 = vmatpush2.bf16.msra.mxu0 0
          %398 = vmatprep.subr.bf16.mxu0 0
          %399 = vmatpush2.bf16.msra.mxu0 0
          %400 = vmatprep.subr.bf16.mxu0 0
          %401 = vmatpush2.bf16.msra.mxu0 0
          %402 = vmatprep.subr.bf16.mxu0 0
          %403 = vmatpush2.bf16.msra.mxu0 0
          %404 = vmatprep.subr.bf16.mxu0 0
          %405 = vmatpush2.bf16.msra.mxu0 0
          %406 = vmatprep.subr.bf16.mxu0 0
          %407 = vmatpush2.bf16.msra.mxu0 0
          %408 = vmatprep.subr.bf16.mxu0 0
          %409 = vmatpush2.bf16.msra.mxu0 0
          %410 = vmatprep.mubr.bf16.mxu0 0
          %411 = vmatmul.mubr.bf16.gmra.mxu0 %v363
          %v412 = vpop.f32.mrf.mxu0
          %v413 = vadd.f32 0.0, %v412
          %v414 = vpop.f32.mrf.mxu0
          %v415 = vpop.f32.mrf.mxu0
          %v416 = vadd.f32 0.0, %v415
          %v417 = vpop.f32.mrf.mxu0
          %418 = vmatprep.mubr.bf16.mxu0 0
          %419 = vmatmul.mubr.bf16.gmra.mxu0 %v366
          %v420 = vpop.f32.mrf.mxu0
          %v421 = vadd.f32 0.0, %v420
          %v422 = vpop.f32.mrf.mxu0
          %v423 = vpop.f32.mrf.mxu0
          %v424 = vadd.f32 0.0, %v423
          %v425 = vpop.f32.mrf.mxu0
          %426 = vmatprep.mubr.bf16.mxu0 0
          %427 = vmatmul.mubr.bf16.gmra.mxu0 %v369
          %v428 = vpop.f32.mrf.mxu0
          %v429 = vadd.f32 0.0, %v428
          %v430 = vpop.f32.mrf.mxu0
          %v431 = vpop.f32.mrf.mxu0
          %v432 = vadd.f32 0.0, %v431
          %v433 = vpop.f32.mrf.mxu0
          %434 = vmatprep.mubr.bf16.mxu0 0
          %435 = vmatmul.mubr.bf16.gmra.mxu0 %v372
          %v436 = vpop.f32.mrf.mxu0
          %v437 = vadd.f32 0.0, %v436
          %v438 = vpop.f32.mrf.mxu0
          %v439 = vpop.f32.mrf.mxu0
          %v440 = vadd.f32 0.0, %v439
          %v441 = vpop.f32.mrf.mxu0
          %442 = vdwg.mxu0
          %v443 = vpack.c.bf16 %v416, %v413
          %v444 = vpack.c.bf16 %v424, %v421
          %v445 = vpack.c.bf16 %v432, %v429
          %v446 = vpack.c.bf16 %v440, %v437
          %v447 = vld [vmem:[%s4] sm:$0xf]
          %v448 = vld [vmem:[%s4 + $0x4] sm:$0xf]
          %v449 = vld [vmem:[%s4 + $0x8] sm:$0xf]
          %v453 = vunpack.c.l.b16 %v447
          %v454 = vunpack.c.l.b16 %v448
          %v455 = vunpack.c.l.b16 %v449
          %v456 = vpack.c.b16 %v454, %v453
          %v457 = vpack.c.b16 %v455, %v455
          %vm459 = vcmask 195584
          %v461 = vsel %vm459, %v443, 0
          %v464 = vsel %vm459, %v444, 0
          %v467 = vsel %vm459, %v445, 0
          %v470 = vsel %vm459, %v446, 0
          %vm472 = vcmask 1043456
          %v474 = vsel %vm472, %v457, 0
          %476 = vmatprep.subr.bf16.mxu0 0
          %477 = vmatpush1.bf16.msra.mxu0 0
          %478 = vmatprep.subr.bf16.mxu0 0
          %479 = vmatpush1.bf16.msra.mxu0 0
          %480 = vmatprep.subr.bf16.mxu0 0
          %481 = vmatpush1.bf16.msra.mxu0 0
          %482 = vmatprep.subr.bf16.mxu0 0
          %483 = vmatpush1.bf16.msra.mxu0 0
          %484 = vmatprep.subr.bf16.mxu0 0
          %485 = vmatpush1.bf16.msra.mxu0 0
          %486 = vmatprep.subr.bf16.mxu0 0
          %487 = vmatpush1.bf16.msra.mxu0 0
          %488 = vmatprep.subr.bf16.mxu0 0
          %489 = vmatpush1.bf16.msra.mxu0 %v474
          %490 = vmatprep.subr.bf16.mxu0 0
          %491 = vmatpush1.bf16.msra.mxu0 %v456
          %492 = vmatprep.subr.bf16.mxu0 0
          %493 = vmatpush2.bf16.msra.mxu0 0
          %494 = vmatprep.subr.bf16.mxu0 0
          %495 = vmatpush2.bf16.msra.mxu0 0
          %496 = vmatprep.subr.bf16.mxu0 0
          %497 = vmatpush2.bf16.msra.mxu0 0
          %498 = vmatprep.subr.bf16.mxu0 0
          %499 = vmatpush2.bf16.msra.mxu0 0
          %500 = vmatprep.subr.bf16.mxu0 0
          %501 = vmatpush2.bf16.msra.mxu0 0
          %502 = vmatprep.subr.bf16.mxu0 0
          %503 = vmatpush2.bf16.msra.mxu0 0
          %504 = vmatprep.subr.bf16.mxu0 0
          %505 = vmatpush2.bf16.msra.mxu0 0
          %506 = vmatprep.subr.bf16.mxu0 0
          %507 = vmatpush2.bf16.msra.mxu0 0
          %508 = vmatprep.mubr.bf16.mxu0 0
          %509 = vmatmul.mubr.bf16.gmra.mxu0 %v461
          %v510 = vpop.f32.mrf.mxu0
          %v511 = vadd.f32 0.0, %v510
          %v512 = vpop.f32.mrf.mxu0
          %v513 = vpop.f32.mrf.mxu0
          %v514 = vadd.f32 0.0, %v513
          %v515 = vpop.f32.mrf.mxu0
          %516 = vmatprep.mubr.bf16.mxu0 0
          %517 = vmatmul.mubr.bf16.gmra.mxu0 %v464
          %v518 = vpop.f32.mrf.mxu0
          %v519 = vadd.f32 0.0, %v518
          %v520 = vpop.f32.mrf.mxu0
          %v521 = vpop.f32.mrf.mxu0
          %v522 = vadd.f32 0.0, %v521
          %v523 = vpop.f32.mrf.mxu0
          %524 = vmatprep.mubr.bf16.mxu0 0
          %525 = vmatmul.mubr.bf16.gmra.mxu0 %v467
          %v526 = vpop.f32.mrf.mxu0
          %v527 = vadd.f32 0.0, %v526
          %v528 = vpop.f32.mrf.mxu0
          %v529 = vpop.f32.mrf.mxu0
          %v530 = vadd.f32 0.0, %v529
          %v531 = vpop.f32.mrf.mxu0
          %532 = vmatprep.mubr.bf16.mxu0 0
          %533 = vmatmul.mubr.bf16.gmra.mxu0 %v470
          %v534 = vpop.f32.mrf.mxu0
          %v535 = vadd.f32 0.0, %v534
          %v536 = vpop.f32.mrf.mxu0
          %v537 = vpop.f32.mrf.mxu0
          %v538 = vadd.f32 0.0, %v537
          %v539 = vpop.f32.mrf.mxu0
          %540 = vdwg.mxu0
          %s541 = sld [smem:[#allocation2 + %s27]]
          %s542 = sld [smem:[#allocation5 + %s27]]
          %s543 = sadd.s32 %s316, 64
          %p544 = scmp.le.s32.totalorder %s543, 32
          // Predicated region
          $region57: #{tpu_custom_call.1} parent=55 // pred_check
            %p545 = pneg %p544
          $region58: #{tpu_custom_call.1} parent=55 // pred_check_branch
            %547 = sbr.rel (%p545) target = $region60
          $region59: #{tpu_custom_call.1} parent=55 // pred_region
            %v548 = vstv %s541
            %v549 = vmul.f32 %v548, %v511
            %v550 = vmul.f32 %v548, %v514
            %v551 = vmul.f32 %v548, %v519
            %v552 = vmul.f32 %v548, %v522
            %v553 = vmul.f32 %v548, %v527
            %v554 = vmul.f32 %v548, %v530
            %v555 = vmul.f32 %v548, %v535
            %v556 = vmul.f32 %v548, %v538
            %v557 = vld [vmem:[%s5] sm:$0x1]
            %v558 = vstv %s542
            %v559 = vmul.f32 %v558, %v557
            %v561 = vlaneseq
            %v562 = vshrl.u32 %v561, 7
            %v563 = vsub.s32 0, %v562
            %v564 = vrot.slane %v559, %v563
            %v566 = vsub.f32 %v549, %v564
            %v567 = vsub.f32 %v550, %v564
            %v568 = vsub.f32 %v551, %v564
            %v569 = vsub.f32 %v552, %v564
            %v570 = vsub.f32 %v553, %v564
            %v571 = vsub.f32 %v554, %v564
            %v572 = vsub.f32 %v555, %v564
            %v573 = vsub.f32 %v556, %v564
            %vm574 = vcmask 523264
            %575 = vst.msk [vmem:[%s302] sm:$0xff] %vm574, %v566
            %576 = vst.msk [vmem:[%s302 + $0x8] sm:$0xff] %vm574, %v567
            %577 = vst.msk [vmem:[%s302 + $0x10] sm:$0xff] %vm574, %v568
            %578 = vst.msk [vmem:[%s302 + $0x18] sm:$0xff] %vm574, %v569
            %579 = vst.msk [vmem:[%s302 + $0x20] sm:$0xff] %vm574, %v570
            %580 = vst.msk [vmem:[%s302 + $0x28] sm:$0xff] %vm574, %v571
            %581 = vst.msk [vmem:[%s302 + $0x30] sm:$0xff] %vm574, %v572
            %582 = vst.msk [vmem:[%s302 + $0x38] sm:$0xff] %vm574, %v573
          $region60: #{tpu_custom_call.1} parent=55 // pred_fallthru
            _
          %p583 = scmp.gt.s32.totalorder %s543, 32
          // Predicated region
          $region61: #{tpu_custom_call.1} parent=55 // pred_check
            %p584 = pneg %p583
          $region62: #{tpu_custom_call.1} parent=55 // pred_check_branch
            %586 = sbr.rel (%p584) target = $region64
          $region63: #{tpu_custom_call.1} parent=55 // pred_region
            %v587 = vlaneseq
            %v588 = vshrl.u32 %v587, 7
            %v589 = vadd.s32 %v588, 8
            %v590 = vadd.s32 %v588, 16
            %v591 = vadd.s32 %v588, 24
            %v592 = vadd.s32 %v588, 32
            %v593 = vadd.s32 %v588, 40
            %v594 = vadd.s32 %v588, 48
            %v595 = vadd.s32 %v588, 56
            %v596 = vstv %s316
            %v597 = vadd.s32 %v588, %v596
            %v598 = vadd.s32 %v589, %v596
            %v599 = vadd.s32 %v590, %v596
            %v600 = vadd.s32 %v591, %v596
            %v601 = vadd.s32 %v592, %v596
            %v602 = vadd.s32 %v593, %v596
            %v603 = vadd.s32 %v594, %v596
            %v604 = vadd.s32 %v595, %v596
            %vm605 = vcmp.lt.s32.totalorder %v597, 32
            %vm606 = vcmp.lt.s32.totalorder %v598, 32
            %vm607 = vcmp.lt.s32.totalorder %v599, 32
            %vm608 = vcmp.lt.s32.totalorder %v600, 32
            %vm609 = vcmp.lt.s32.totalorder %v601, 32
            %vm610 = vcmp.lt.s32.totalorder %v602, 32
            %vm611 = vcmp.lt.s32.totalorder %v603, 32
            %vm612 = vcmp.lt.s32.totalorder %v604, 32
            %v613 = vsel %vm605, 1, 0
            %v614 = vsel %vm606, 1, 0
            %v615 = vsel %vm607, 1, 0
            %v616 = vsel %vm608, 1, 0
            %v617 = vsel %vm609, 1, 0
            %v618 = vsel %vm610, 1, 0
            %v619 = vsel %vm611, 1, 0
            %v620 = vsel %vm612, 1, 0
            %v621 = vcvt.s32.f32 %v613
            %v622 = vcvt.s32.f32 %v614
            %v623 = vcvt.s32.f32 %v615
            %v624 = vcvt.s32.f32 %v616
            %v625 = vcvt.s32.f32 %v617
            %v626 = vcvt.s32.f32 %v618
            %v627 = vcvt.s32.f32 %v619
            %v628 = vcvt.s32.f32 %v620
            %v629 = vstv %s541
            %v630 = vmul.f32 %v629, %v511
            %v631 = vmul.f32 %v629, %v514
            %v632 = vmul.f32 %v629, %v519
            %v633 = vmul.f32 %v629, %v522
            %v634 = vmul.f32 %v629, %v527
            %v635 = vmul.f32 %v629, %v530
            %v636 = vmul.f32 %v629, %v535
            %v637 = vmul.f32 %v629, %v538
            %v638 = vld [vmem:[%s5] sm:$0x1]
            %v640 = vlaneseq
            %v641 = vshrl.u32 %v640, 7
            %v642 = vsub.s32 0, %v641
            %v643 = vrot.slane %v638, %v642
            %v645 = vmul.f32 %v621, %v643
            %v646 = vmul.f32 %v622, %v643
            %v647 = vmul.f32 %v623, %v643
            %v648 = vmul.f32 %v624, %v643
            %v649 = vmul.f32 %v625, %v643
            %v650 = vmul.f32 %v626, %v643
            %v651 = vmul.f32 %v627, %v643
            %v652 = vmul.f32 %v628, %v643
            %v653 = vstv %s542
            %v654 = vmul.f32 %v653, %v645
            %v655 = vmul.f32 %v653, %v646
            %v656 = vmul.f32 %v653, %v647
            %v657 = vmul.f32 %v653, %v648
            %v658 = vmul.f32 %v653, %v649
            %v659 = vmul.f32 %v653, %v650
            %v660 = vmul.f32 %v653, %v651
            %v661 = vmul.f32 %v653, %v652
            %v662 = vsub.f32 %v630, %v654
            %v663 = vsub.f32 %v631, %v655
            %v664 = vsub.f32 %v632, %v656
            %v665 = vsub.f32 %v633, %v657
            %v666 = vsub.f32 %v634, %v658
            %v667 = vsub.f32 %v635, %v659
            %v668 = vsub.f32 %v636, %v660
            %v669 = vsub.f32 %v637, %v661
            %vm670 = vcmask 523264
            %671 = vst.msk [vmem:[%s302] sm:$0xff] %vm670, %v662
            %672 = vst.msk [vmem:[%s302 + $0x8] sm:$0xff] %vm670, %v663
            %673 = vst.msk [vmem:[%s302 + $0x10] sm:$0xff] %vm670, %v664
            %674 = vst.msk [vmem:[%s302 + $0x18] sm:$0xff] %vm670, %v665
            %675 = vst.msk [vmem:[%s302 + $0x20] sm:$0xff] %vm670, %v666
            %676 = vst.msk [vmem:[%s302 + $0x28] sm:$0xff] %vm670, %v667
            %677 = vst.msk [vmem:[%s302 + $0x30] sm:$0xff] %vm670, %v668
            %678 = vst.msk [vmem:[%s302 + $0x38] sm:$0xff] %vm670, %v669
          $region64: #{tpu_custom_call.1} parent=55 // pred_fallthru
            _
        $region56: #{tpu_custom_call.1} parent=43 // pred_fallthru
          _
        %p679 = scmp.ge.s32.totalorder %s316, 32
        // Predicated region
        $region65: #{tpu_custom_call.1} parent=43 // pred_check
          %p680 = pneg %p679
        $region66: #{tpu_custom_call.1} parent=43 // pred_check_branch
          %682 = sbr.rel (%p680) target = $region68
        $region67: #{tpu_custom_call.1} parent=43 // pred_region
          %vm683 = vcmask 523264
          %684 = vst.msk [vmem:[%s302] sm:$0xff] %vm683, 0.0
          %685 = vst.msk [vmem:[%s302 + $0x8] sm:$0xff] %vm683, 0.0
          %686 = vst.msk [vmem:[%s302 + $0x10] sm:$0xff] %vm683, 0.0
          %687 = vst.msk [vmem:[%s302 + $0x18] sm:$0xff] %vm683, 0.0
          %688 = vst.msk [vmem:[%s302 + $0x20] sm:$0xff] %vm683, 0.0
          %689 = vst.msk [vmem:[%s302 + $0x28] sm:$0xff] %vm683, 0.0
          %690 = vst.msk [vmem:[%s302 + $0x30] sm:$0xff] %vm683, 0.0
          %691 = vst.msk [vmem:[%s302 + $0x38] sm:$0xff] %vm683, 0.0
        $region68: #{tpu_custom_call.1} parent=43 // pred_fallthru
          _
        %s692 = sand.u32 %s181, 1
        %s693 = scalar_lea.sflag [#allocation3], %s692
        %s694 = sand.u32 %s181, 1
        %s695 = smul.addr %s694, 64
        %s696 = scalar_lea.vmem [#allocation7], %s695
        // Predicated region
        $region69: #{tpu_custom_call.1} parent=43 // pred_check
          %p697 = pneg %p191
        $region70: #{tpu_custom_call.1} parent=43 // pred_check_branch
          %699 = sbr.rel (%p697) target = $region72
        $region71: #{tpu_custom_call.1} parent=43 // pred_region
          %s700 = smul.u32 8, %s28
          %s702 = ssub.s32 1024, 1024
          %703 = vsyncadd %s693, %s702
          %s704 = smul.addr %s27, 8
          %s705 = sadd.s32 %s700, %s704
          %s706 = smul.addr %s705, 128
          %s707 = scalar_lea.hbm %s7, %s706
          %s708 = sshll.u32 %s696, 4
          %s709 = int_to_ptr.vmem [resolvable:$true] %s708
          %714 = dma.vmem_to_hbm [thread:$0]  %s709, 1024, %s707, %s693, 128, 128, 8
        $region72: #{tpu_custom_call.1} parent=43 // pred_fallthru
          _
      $region44: #{tpu_custom_call.1} parent=5 // pred_fallthru
        _
      %p715 = scmp.le.s32.totalorder 2, %s18
      // Predicated region
      $region73: #{tpu_custom_call.1} parent=5 // pred_check
        %p716 = pneg %p715
      $region74: #{tpu_custom_call.1} parent=5 // pred_check_branch
        %718 = sbr.rel (%p716) target = $region76
      $region75: #{tpu_custom_call.1} parent=5 // pred_region
        %s719 = ssub.s32 %s18, 2
        // Predicated region
        $region77: #{tpu_custom_call.1} parent=75 // pred_check
          %p720 = pneg %p197
        $region78: #{tpu_custom_call.1} parent=75 // pred_check_branch
          %722 = sbr.rel (%p720) target = $region80
        $region79: #{tpu_custom_call.1} parent=75 // pred_region
          %s723 = sand.u32 %s182, 1
          %s724 = scalar_lea.sflag [#allocation3], %s723
          %s725 = sand.u32 %s182, 1
          %s726 = smul.addr %s725, 64
          %s727 = scalar_lea.vmem [#allocation7], %s726
          %728 = dma.done %s724, 1024
        $region80: #{tpu_custom_call.1} parent=75 // pred_fallthru
          _
      $region76: #{tpu_custom_call.1} parent=5 // pred_fallthru
        _
    $region6: #{tpu_custom_call.1} parent=1 // loop_footer
      %s22 = sadd.s32 1, %s18
    $region7: #{tpu_custom_call.1} parent=1 // loop_footer_branch
      %17 = sbr.rel target = $region3
    $region8: #{tpu_custom_call.1} parent=1 // loop_exit
      _
    %729 = vsyncpa [#allocation3], 1
    %s730 = scalar_lea.sflag [#allocation3], 1
    %731 = vsyncpa %s730, 1
    %732 = vsyncpa [#allocation4], 1
    %s733 = scalar_lea.sflag [#allocation4], 1
    %734 = vsyncpa %s733, 1
    %735 = vsyncpa [#allocation6], 1

</llo_original>
